<compile_context>
chip_gen: v6e
topology: v6e:2x2x1
jax: 0.10.0
libtpu: 0.0.40
codegen_flags: <defaults>
</compile_context>

<pallas_src>
import functools

import jax
import jax.numpy as jnp
from jax.experimental import pallas as pl
from jax.experimental.pallas import tpu as pltpu

EPS = 1e-5  # BatchNorm2d default eps


def _fused_conv_bn_kernel(x_ref, w_ref, gb_ref, msk_ref, out_ref, ss_ref,
                          *, cin, kh, kw, img_w, sm, cout, inv_l):
    """Two-phase fused conv + training-mode BN + branch-sum kernel.

    Grid = (phase, batch-tile).  In-kernel layout convention:
      leading ("page") axis = images in the batch tile (NB)
      sublane axis          = output channel of both branches stacked (C2 = 8)
      lane axis             = spatial position s = oy*W + ox (ox >= OW is garbage)

    x_ref  : (NB, Cin, HWP) f32   input tile, HWP = H*W (+ small pad)
    w_ref  : (1, C2, K)     f32   stacked conv weights of both branches
    gb_ref : (1, C2, 2)     f32   packed [gamma | beta] of both branches
    msk_ref: (1, 1, SM)     f32   1.0 on valid columns (ox < OW), else 0.0
    out_ref: (NB, COUT, SM) f32   branch-summed output (written in phase 1 only)
    ss_ref : (1, C2, 2)     f32   scratch: [sum|sumsq] during phase 0,
                                  [scale|shift] after its last step
    """
    phase = pl.program_id(0)
    step = pl.program_id(1)
    c2 = 2 * cout

    # ---- fused im2col: conv as K = Cin*KH*KW lane-shifted broadcast FMAs ----
    x = x_ref[...]                                      # (NB, Cin, HWP)
    w = w_ref[...]                                      # (1, C2, K)
    nb = x.shape[0]
    y = jnp.zeros((nb, c2, sm), jnp.float32)
    for ci in range(cin):
        for ki in range(kh):
            for kj in range(kw):
                k = (ci * kh + ki) * kw + kj
                off = ki * img_w + kj
                xk = x[:, ci:ci + 1, off:off + sm]      # (NB, 1, SM)
                y = y + w[:, :, k:k + 1] * xk           # (1,C2,1)*(NB,1,SM)->(NB,C2,SM)

    @pl.when(phase == 0)
    def _stats_phase():
        @pl.when(step == 0)
        def _init():
            ss_ref[...] = jnp.zeros(ss_ref.shape, ss_ref.dtype)

        ym = y * msk_ref[...]                           # zero out garbage columns
        s1 = jnp.sum(jnp.sum(ym, axis=2, keepdims=True), axis=0, keepdims=True)
        s2 = jnp.sum(jnp.sum(ym * y, axis=2, keepdims=True), axis=0, keepdims=True)
        # Single full (1, C2, 2) accumulate per step (no masked sub-column stores).
        ss_ref[...] = ss_ref[...] + jnp.concatenate([s1, s2], axis=2)

        @pl.when(step == pl.num_programs(1) - 1)
        def _finalize():
            acc = ss_ref[...]                           # (1, C2, 2): [sum | sumsq]
            mu = acc[:, :, 0:1] * inv_l
            var = jnp.maximum(acc[:, :, 1:2] * inv_l - mu * mu, 0.0)  # clamp >= 0
            scale = gb_ref[:, :, 0:1] * jax.lax.rsqrt(var + EPS)
            shift = gb_ref[:, :, 1:2] - mu * scale
            ss_ref[...] = jnp.concatenate([scale, shift], axis=2)

    @pl.when(phase == 1)
    def _apply_phase():
        ss = ss_ref[...]                                # (1, C2, 2): [scale | shift]
        z = y * ss[:, :, 0:1] + ss[:, :, 1:2]           # (NB, C2, SM)
        out_ref[...] = z[:, 0:cout, :] + z[:, cout:c2, :]


def model_forward(x, params):
    """x: (N, Cin, H, W) f32 -> (N, Cout, OH, OW) f32 (two Conv+BN branches summed)."""
    (w1, _b1, g1, be1), (w2, _b2, g2, be2) = params   # conv biases cancel under training BN
    cout, cin, kh, kw = w1.shape
    n, _, h, wd = x.shape
    oh, ow = h - kh + 1, wd - kw + 1
    c2 = 2 * cout
    k = cin * kh * kw
    sm = oh * wd                                       # W-strided spatial span on lanes
    hwp = max(h * wd, (kh - 1) * wd + (kw - 1) + sm)   # keep every shifted window in range

    # Batch tile: the only tiling knob; per-buffer VMEM ~= NB*Cin*HWP*4 B (double
    # buffered), trivially within v5e/v6e (128 MiB) and v7x (64 MiB) VMEM.
    nb = 8 if n % 8 == 0 else n

    # (N, Cin, H*W) is a free reshape of NCHW; tiny lane pad so every tap window fits.
    xr = x.reshape(n, cin, h * wd).astype(jnp.float32)
    if hwp > h * wd:
        xr = jnp.pad(xr, ((0, 0), (0, 0), (0, hwp - h * wd)))

    # Both branches' weights stacked along the channel (sublane) axis; bias omitted
    # (a per-channel constant is removed exactly by BN mean subtraction).
    w_in = jnp.concatenate([w1.reshape(cout, k),
                            w2.reshape(cout, k)], axis=0)[None].astype(jnp.float32)   # (1, C2, K)
    gb_in = jnp.stack([jnp.concatenate([g1, g2]),
                       jnp.concatenate([be1, be2])], axis=1)[None].astype(jnp.float32)  # (1, C2, 2)

    # Valid-column mask (ox < OW) over the W-strided spatial lanes.
    msk = (jnp.arange(sm) % wd < ow).astype(jnp.float32)[None, None, :]                 # (1, 1, SM)

    inv_l = 1.0 / float(n * oh * ow)
    grid = (2, n // nb)                                # (phase, batch tile)
    vmem = pl.BlockSpec(memory_space=pltpu.MemorySpace.VMEM)  # small operands fully resident

    out = pl.pallas_call(
        functools.partial(_fused_conv_bn_kernel, cin=cin, kh=kh, kw=kw,
                          img_w=wd, sm=sm, cout=cout, inv_l=inv_l),
        grid=grid,
        in_specs=[pl.BlockSpec((nb, cin, hwp), lambda p, i: (i, 0, 0)),
                  vmem, vmem, vmem],
        # Phase 0 never writes the output: pin its block index at 0 so no garbage
        # blocks are flushed to HBM; phase 1 streams blocks 0..N/NB-1.
        out_specs=pl.BlockSpec((nb, cout, sm), lambda p, i: (i * p, 0, 0)),
        out_shape=jax.ShapeDtypeStruct((n, cout, sm), jnp.float32),
        scratch_shapes=[pltpu.VMEM((1, c2, 2), jnp.float32)],
        # Both axes "arbitrary": the stats scratch carries state across steps and
        # across the phase boundary (must not be sharded across cores).
        compiler_params=pltpu.CompilerParams(
            dimension_semantics=("arbitrary", "arbitrary")),
    )(xr, w_in, gb_in, msk)

    # (N, Cout, OH*W) -> (N, Cout, OH, W) is a free reshape; drop the KW-1 garbage cols.
    return out.reshape(n, cout, oh, wd)[..., :ow]


def init_params(key, cin=3, cout=4, k=3):
    """PyTorch-style conv init; gamma/beta randomized so the BN affine path is exercised."""
    fan_in = cin * k * k
    bound = 1.0 / jnp.sqrt(jnp.float32(fan_in))
    keys = jax.random.split(key, 8)

    def branch(kw_, kb_, kg_, kbt_):
        w = jax.random.uniform(kw_, (cout, cin, k, k), jnp.float32, -bound, bound)
        b = jax.random.uniform(kb_, (cout,), jnp.float32, -bound, bound)
        gamma = jax.random.uniform(kg_, (cout,), jnp.float32, 0.5, 1.5)
        beta = jax.random.uniform(kbt_, (cout,), jnp.float32, -0.5, 0.5)
        return (w, b, gamma, beta)

    return (branch(*keys[0:4]), branch(*keys[4:8]))


def _reference(x, params):
    """Pure-JAX fp32 reference: conv (with bias) -> training-mode BN, branches summed."""
    def branch(w, b, gamma, beta):
        y = jax.lax.conv_general_dilated(
            x, w, window_strides=(1, 1), padding="VALID",
            dimension_numbers=("NCHW", "OIHW", "NCHW")) + b.reshape(1, -1, 1, 1)
        mu = jnp.mean(y, axis=(0, 2, 3), keepdims=True)
        var = jnp.mean((y - mu) ** 2, axis=(0, 2, 3), keepdims=True)
        return (y - mu) * jax.lax.rsqrt(var + EPS) * gamma.reshape(1, -1, 1, 1) \
               + beta.reshape(1, -1, 1, 1)

    return branch(*params[0]) + branch(*params[1])


if __name__ == "__main__":
    key = jax.random.PRNGKey(0)
    kx, kp = jax.random.split(key)
    # Small NCHW input (batch enlarged so the batch-tile grid has 4 steps per phase).
    x = jax.random.normal(kx, (32, 3, 10, 10), jnp.float32)
    params = init_params(kp)

    fwd = jax.jit(model_forward)
    out = jax.block_until_ready(fwd(x, params))

    ref = _reference(x, params)
    assert out.shape == (32, 4, 8, 8), out.shape
    max_err = float(jnp.max(jnp.abs(out - ref)))
    # All-f32 kernel vs f32 reference: only summation-order / single-pass-var noise.
    assert jnp.allclose(out, ref, atol=2e-3, rtol=2e-3), max_err
    print("KERNEL_OK")
</pallas_src>

<mosaic_0001>
module attributes {stable_mosaic.version = 11 : i64} {
  func.func @_fused_conv_bn_kernel(%arg0: i32, %arg1: i32, %arg2: memref<8x3x102xf32, #tpu.memory_space<vmem>>, %arg3: memref<1x8x27xf32, #tpu.memory_space<vmem>>, %arg4: memref<1x8x2xf32, #tpu.memory_space<vmem>>, %arg5: memref<1x1x80xf32, #tpu.memory_space<vmem>>, %arg6: memref<8x4x80xf32, #tpu.memory_space<vmem>>, %arg7: memref<1x8x2xf32, #tpu.memory_space<vmem>>) attributes {dimension_semantics = [#tpu.dimension_semantics<arbitrary>, #tpu.dimension_semantics<arbitrary>], iteration_bounds = array<i64: 2, 4>, scalar_prefetch = 0 : i64, scratch_operands = 1 : i64, tpu.core_type = #tpu.core_type<tc>, window_params = [{transform_indices = @transform_0, window_bounds = array<i64: 8, 3, 102>}, {pipeline_mode = #tpu.pipeline_mode<synchronous>, transform_indices = @transform_1, window_bounds = array<i64: 1, 8, 27>}, {pipeline_mode = #tpu.pipeline_mode<synchronous>, transform_indices = @transform_2, window_bounds = array<i64: 1, 8, 2>}, {pipeline_mode = #tpu.pipeline_mode<synchronous>, transform_indices = @transform_3, window_bounds = array<i64: 1, 1, 80>}, {transform_indices = @transform_4, window_bounds = array<i64: 8, 4, 80>}]} {
    %c0 = arith.constant 0 : index
    %c0_0 = arith.constant 0 : index
    %c0_1 = arith.constant 0 : index
    %0 = vector.load %arg2[%c0, %c0_0, %c0_1] : memref<8x3x102xf32, #tpu.memory_space<vmem>>, vector<8x3x102xf32>
    %c0_2 = arith.constant 0 : index
    %c0_3 = arith.constant 0 : index
    %c0_4 = arith.constant 0 : index
    %1 = vector.load %arg3[%c0_2, %c0_3, %c0_4] : memref<1x8x27xf32, #tpu.memory_space<vmem>>, vector<1x8x27xf32>
    %cst = arith.constant 0.000000e+00 : f32
    %2 = vector.broadcast %cst : f32 to vector<8x8x80xf32>
    %3 = vector.extract_strided_slice %0 {offsets = [0, 0, 0], sizes = [8, 1, 80], strides = [1, 1, 1]} : vector<8x3x102xf32> to vector<8x1x80xf32>
    %4 = vector.extract_strided_slice %1 {offsets = [0, 0, 0], sizes = [1, 8, 1], strides = [1, 1, 1]} : vector<1x8x27xf32> to vector<1x8x1xf32>
    %5 = vector.broadcast %4 : vector<1x8x1xf32> to vector<8x8x80xf32>
    %6 = vector.broadcast %3 : vector<8x1x80xf32> to vector<8x8x80xf32>
    %7 = arith.mulf %5, %6 : vector<8x8x80xf32>
    %8 = arith.addf %2, %7 : vector<8x8x80xf32>
    %9 = vector.extract_strided_slice %0 {offsets = [0, 0, 1], sizes = [8, 1, 80], strides = [1, 1, 1]} : vector<8x3x102xf32> to vector<8x1x80xf32>
    %10 = vector.extract_strided_slice %1 {offsets = [0, 0, 1], sizes = [1, 8, 1], strides = [1, 1, 1]} : vector<1x8x27xf32> to vector<1x8x1xf32>
    %11 = vector.broadcast %10 : vector<1x8x1xf32> to vector<8x8x80xf32>
    %12 = vector.broadcast %9 : vector<8x1x80xf32> to vector<8x8x80xf32>
    %13 = arith.mulf %11, %12 : vector<8x8x80xf32>
    %14 = arith.addf %8, %13 : vector<8x8x80xf32>
    %15 = vector.extract_strided_slice %0 {offsets = [0, 0, 2], sizes = [8, 1, 80], strides = [1, 1, 1]} : vector<8x3x102xf32> to vector<8x1x80xf32>
    %16 = vector.extract_strided_slice %1 {offsets = [0, 0, 2], sizes = [1, 8, 1], strides = [1, 1, 1]} : vector<1x8x27xf32> to vector<1x8x1xf32>
    %17 = vector.broadcast %16 : vector<1x8x1xf32> to vector<8x8x80xf32>
    %18 = vector.broadcast %15 : vector<8x1x80xf32> to vector<8x8x80xf32>
    %19 = arith.mulf %17, %18 : vector<8x8x80xf32>
    %20 = arith.addf %14, %19 : vector<8x8x80xf32>
    %21 = vector.extract_strided_slice %0 {offsets = [0, 0, 10], sizes = [8, 1, 80], strides = [1, 1, 1]} : vector<8x3x102xf32> to vector<8x1x80xf32>
    %22 = vector.extract_strided_slice %1 {offsets = [0, 0, 3], sizes = [1, 8, 1], strides = [1, 1, 1]} : vector<1x8x27xf32> to vector<1x8x1xf32>
    %23 = vector.broadcast %22 : vector<1x8x1xf32> to vector<8x8x80xf32>
    %24 = vector.broadcast %21 : vector<8x1x80xf32> to vector<8x8x80xf32>
    %25 = arith.mulf %23, %24 : vector<8x8x80xf32>
    %26 = arith.addf %20, %25 : vector<8x8x80xf32>
    %27 = vector.extract_strided_slice %0 {offsets = [0, 0, 11], sizes = [8, 1, 80], strides = [1, 1, 1]} : vector<8x3x102xf32> to vector<8x1x80xf32>
    %28 = vector.extract_strided_slice %1 {offsets = [0, 0, 4], sizes = [1, 8, 1], strides = [1, 1, 1]} : vector<1x8x27xf32> to vector<1x8x1xf32>
    %29 = vector.broadcast %28 : vector<1x8x1xf32> to vector<8x8x80xf32>
    %30 = vector.broadcast %27 : vector<8x1x80xf32> to vector<8x8x80xf32>
    %31 = arith.mulf %29, %30 : vector<8x8x80xf32>
    %32 = arith.addf %26, %31 : vector<8x8x80xf32>
    %33 = vector.extract_strided_slice %0 {offsets = [0, 0, 12], sizes = [8, 1, 80], strides = [1, 1, 1]} : vector<8x3x102xf32> to vector<8x1x80xf32>
    %34 = vector.extract_strided_slice %1 {offsets = [0, 0, 5], sizes = [1, 8, 1], strides = [1, 1, 1]} : vector<1x8x27xf32> to vector<1x8x1xf32>
    %35 = vector.broadcast %34 : vector<1x8x1xf32> to vector<8x8x80xf32>
    %36 = vector.broadcast %33 : vector<8x1x80xf32> to vector<8x8x80xf32>
    %37 = arith.mulf %35, %36 : vector<8x8x80xf32>
    %38 = arith.addf %32, %37 : vector<8x8x80xf32>
    %39 = vector.extract_strided_slice %0 {offsets = [0, 0, 20], sizes = [8, 1, 80], strides = [1, 1, 1]} : vector<8x3x102xf32> to vector<8x1x80xf32>
    %40 = vector.extract_strided_slice %1 {offsets = [0, 0, 6], sizes = [1, 8, 1], strides = [1, 1, 1]} : vector<1x8x27xf32> to vector<1x8x1xf32>
    %41 = vector.broadcast %40 : vector<1x8x1xf32> to vector<8x8x80xf32>
    %42 = vector.broadcast %39 : vector<8x1x80xf32> to vector<8x8x80xf32>
    %43 = arith.mulf %41, %42 : vector<8x8x80xf32>
    %44 = arith.addf %38, %43 : vector<8x8x80xf32>
    %45 = vector.extract_strided_slice %0 {offsets = [0, 0, 21], sizes = [8, 1, 80], strides = [1, 1, 1]} : vector<8x3x102xf32> to vector<8x1x80xf32>
    %46 = vector.extract_strided_slice %1 {offsets = [0, 0, 7], sizes = [1, 8, 1], strides = [1, 1, 1]} : vector<1x8x27xf32> to vector<1x8x1xf32>
    %47 = vector.broadcast %46 : vector<1x8x1xf32> to vector<8x8x80xf32>
    %48 = vector.broadcast %45 : vector<8x1x80xf32> to vector<8x8x80xf32>
    %49 = arith.mulf %47, %48 : vector<8x8x80xf32>
    %50 = arith.addf %44, %49 : vector<8x8x80xf32>
    %51 = vector.extract_strided_slice %0 {offsets = [0, 0, 22], sizes = [8, 1, 80], strides = [1, 1, 1]} : vector<8x3x102xf32> to vector<8x1x80xf32>
    %52 = vector.extract_strided_slice %1 {offsets = [0, 0, 8], sizes = [1, 8, 1], strides = [1, 1, 1]} : vector<1x8x27xf32> to vector<1x8x1xf32>
    %53 = vector.broadcast %52 : vector<1x8x1xf32> to vector<8x8x80xf32>
    %54 = vector.broadcast %51 : vector<8x1x80xf32> to vector<8x8x80xf32>
    %55 = arith.mulf %53, %54 : vector<8x8x80xf32>
    %56 = arith.addf %50, %55 : vector<8x8x80xf32>
    %57 = vector.extract_strided_slice %0 {offsets = [0, 1, 0], sizes = [8, 1, 80], strides = [1, 1, 1]} : vector<8x3x102xf32> to vector<8x1x80xf32>
    %58 = vector.extract_strided_slice %1 {offsets = [0, 0, 9], sizes = [1, 8, 1], strides = [1, 1, 1]} : vector<1x8x27xf32> to vector<1x8x1xf32>
    %59 = vector.broadcast %58 : vector<1x8x1xf32> to vector<8x8x80xf32>
    %60 = vector.broadcast %57 : vector<8x1x80xf32> to vector<8x8x80xf32>
    %61 = arith.mulf %59, %60 : vector<8x8x80xf32>
    %62 = arith.addf %56, %61 : vector<8x8x80xf32>
    %63 = vector.extract_strided_slice %0 {offsets = [0, 1, 1], sizes = [8, 1, 80], strides = [1, 1, 1]} : vector<8x3x102xf32> to vector<8x1x80xf32>
    %64 = vector.extract_strided_slice %1 {offsets = [0, 0, 10], sizes = [1, 8, 1], strides = [1, 1, 1]} : vector<1x8x27xf32> to vector<1x8x1xf32>
    %65 = vector.broadcast %64 : vector<1x8x1xf32> to vector<8x8x80xf32>
    %66 = vector.broadcast %63 : vector<8x1x80xf32> to vector<8x8x80xf32>
    %67 = arith.mulf %65, %66 : vector<8x8x80xf32>
    %68 = arith.addf %62, %67 : vector<8x8x80xf32>
    %69 = vector.extract_strided_slice %0 {offsets = [0, 1, 2], sizes = [8, 1, 80], strides = [1, 1, 1]} : vector<8x3x102xf32> to vector<8x1x80xf32>
    %70 = vector.extract_strided_slice %1 {offsets = [0, 0, 11], sizes = [1, 8, 1], strides = [1, 1, 1]} : vector<1x8x27xf32> to vector<1x8x1xf32>
    %71 = vector.broadcast %70 : vector<1x8x1xf32> to vector<8x8x80xf32>
    %72 = vector.broadcast %69 : vector<8x1x80xf32> to vector<8x8x80xf32>
    %73 = arith.mulf %71, %72 : vector<8x8x80xf32>
    %74 = arith.addf %68, %73 : vector<8x8x80xf32>
    %75 = vector.extract_strided_slice %0 {offsets = [0, 1, 10], sizes = [8, 1, 80], strides = [1, 1, 1]} : vector<8x3x102xf32> to vector<8x1x80xf32>
    %76 = vector.extract_strided_slice %1 {offsets = [0, 0, 12], sizes = [1, 8, 1], strides = [1, 1, 1]} : vector<1x8x27xf32> to vector<1x8x1xf32>
    %77 = vector.broadcast %76 : vector<1x8x1xf32> to vector<8x8x80xf32>
    %78 = vector.broadcast %75 : vector<8x1x80xf32> to vector<8x8x80xf32>
    %79 = arith.mulf %77, %78 : vector<8x8x80xf32>
    %80 = arith.addf %74, %79 : vector<8x8x80xf32>
    %81 = vector.extract_strided_slice %0 {offsets = [0, 1, 11], sizes = [8, 1, 80], strides = [1, 1, 1]} : vector<8x3x102xf32> to vector<8x1x80xf32>
    %82 = vector.extract_strided_slice %1 {offsets = [0, 0, 13], sizes = [1, 8, 1], strides = [1, 1, 1]} : vector<1x8x27xf32> to vector<1x8x1xf32>
    %83 = vector.broadcast %82 : vector<1x8x1xf32> to vector<8x8x80xf32>
    %84 = vector.broadcast %81 : vector<8x1x80xf32> to vector<8x8x80xf32>
    %85 = arith.mulf %83, %84 : vector<8x8x80xf32>
    %86 = arith.addf %80, %85 : vector<8x8x80xf32>
    %87 = vector.extract_strided_slice %0 {offsets = [0, 1, 12], sizes = [8, 1, 80], strides = [1, 1, 1]} : vector<8x3x102xf32> to vector<8x1x80xf32>
    %88 = vector.extract_strided_slice %1 {offsets = [0, 0, 14], sizes = [1, 8, 1], strides = [1, 1, 1]} : vector<1x8x27xf32> to vector<1x8x1xf32>
    %89 = vector.broadcast %88 : vector<1x8x1xf32> to vector<8x8x80xf32>
    %90 = vector.broadcast %87 : vector<8x1x80xf32> to vector<8x8x80xf32>
    %91 = arith.mulf %89, %90 : vector<8x8x80xf32>
    %92 = arith.addf %86, %91 : vector<8x8x80xf32>
    %93 = vector.extract_strided_slice %0 {offsets = [0, 1, 20], sizes = [8, 1, 80], strides = [1, 1, 1]} : vector<8x3x102xf32> to vector<8x1x80xf32>
    %94 = vector.extract_strided_slice %1 {offsets = [0, 0, 15], sizes = [1, 8, 1], strides = [1, 1, 1]} : vector<1x8x27xf32> to vector<1x8x1xf32>
    %95 = vector.broadcast %94 : vector<1x8x1xf32> to vector<8x8x80xf32>
    %96 = vector.broadcast %93 : vector<8x1x80xf32> to vector<8x8x80xf32>
    %97 = arith.mulf %95, %96 : vector<8x8x80xf32>
    %98 = arith.addf %92, %97 : vector<8x8x80xf32>
    %99 = vector.extract_strided_slice %0 {offsets = [0, 1, 21], sizes = [8, 1, 80], strides = [1, 1, 1]} : vector<8x3x102xf32> to vector<8x1x80xf32>
    %100 = vector.extract_strided_slice %1 {offsets = [0, 0, 16], sizes = [1, 8, 1], strides = [1, 1, 1]} : vector<1x8x27xf32> to vector<1x8x1xf32>
    %101 = vector.broadcast %100 : vector<1x8x1xf32> to vector<8x8x80xf32>
    %102 = vector.broadcast %99 : vector<8x1x80xf32> to vector<8x8x80xf32>
    %103 = arith.mulf %101, %102 : vector<8x8x80xf32>
    %104 = arith.addf %98, %103 : vector<8x8x80xf32>
    %105 = vector.extract_strided_slice %0 {offsets = [0, 1, 22], sizes = [8, 1, 80], strides = [1, 1, 1]} : vector<8x3x102xf32> to vector<8x1x80xf32>
    %106 = vector.extract_strided_slice %1 {offsets = [0, 0, 17], sizes = [1, 8, 1], strides = [1, 1, 1]} : vector<1x8x27xf32> to vector<1x8x1xf32>
    %107 = vector.broadcast %106 : vector<1x8x1xf32> to vector<8x8x80xf32>
    %108 = vector.broadcast %105 : vector<8x1x80xf32> to vector<8x8x80xf32>
    %109 = arith.mulf %107, %108 : vector<8x8x80xf32>
    %110 = arith.addf %104, %109 : vector<8x8x80xf32>
    %111 = vector.extract_strided_slice %0 {offsets = [0, 2, 0], sizes = [8, 1, 80], strides = [1, 1, 1]} : vector<8x3x102xf32> to vector<8x1x80xf32>
    %112 = vector.extract_strided_slice %1 {offsets = [0, 0, 18], sizes = [1, 8, 1], strides = [1, 1, 1]} : vector<1x8x27xf32> to vector<1x8x1xf32>
    %113 = vector.broadcast %112 : vector<1x8x1xf32> to vector<8x8x80xf32>
    %114 = vector.broadcast %111 : vector<8x1x80xf32> to vector<8x8x80xf32>
    %115 = arith.mulf %113, %114 : vector<8x8x80xf32>
    %116 = arith.addf %110, %115 : vector<8x8x80xf32>
    %117 = vector.extract_strided_slice %0 {offsets = [0, 2, 1], sizes = [8, 1, 80], strides = [1, 1, 1]} : vector<8x3x102xf32> to vector<8x1x80xf32>
    %118 = vector.extract_strided_slice %1 {offsets = [0, 0, 19], sizes = [1, 8, 1], strides = [1, 1, 1]} : vector<1x8x27xf32> to vector<1x8x1xf32>
    %119 = vector.broadcast %118 : vector<1x8x1xf32> to vector<8x8x80xf32>
    %120 = vector.broadcast %117 : vector<8x1x80xf32> to vector<8x8x80xf32>
    %121 = arith.mulf %119, %120 : vector<8x8x80xf32>
    %122 = arith.addf %116, %121 : vector<8x8x80xf32>
    %123 = vector.extract_strided_slice %0 {offsets = [0, 2, 2], sizes = [8, 1, 80], strides = [1, 1, 1]} : vector<8x3x102xf32> to vector<8x1x80xf32>
    %124 = vector.extract_strided_slice %1 {offsets = [0, 0, 20], sizes = [1, 8, 1], strides = [1, 1, 1]} : vector<1x8x27xf32> to vector<1x8x1xf32>
    %125 = vector.broadcast %124 : vector<1x8x1xf32> to vector<8x8x80xf32>
    %126 = vector.broadcast %123 : vector<8x1x80xf32> to vector<8x8x80xf32>
    %127 = arith.mulf %125, %126 : vector<8x8x80xf32>
    %128 = arith.addf %122, %127 : vector<8x8x80xf32>
    %129 = vector.extract_strided_slice %0 {offsets = [0, 2, 10], sizes = [8, 1, 80], strides = [1, 1, 1]} : vector<8x3x102xf32> to vector<8x1x80xf32>
    %130 = vector.extract_strided_slice %1 {offsets = [0, 0, 21], sizes = [1, 8, 1], strides = [1, 1, 1]} : vector<1x8x27xf32> to vector<1x8x1xf32>
    %131 = vector.broadcast %130 : vector<1x8x1xf32> to vector<8x8x80xf32>
    %132 = vector.broadcast %129 : vector<8x1x80xf32> to vector<8x8x80xf32>
    %133 = arith.mulf %131, %132 : vector<8x8x80xf32>
    %134 = arith.addf %128, %133 : vector<8x8x80xf32>
    %135 = vector.extract_strided_slice %0 {offsets = [0, 2, 11], sizes = [8, 1, 80], strides = [1, 1, 1]} : vector<8x3x102xf32> to vector<8x1x80xf32>
    %136 = vector.extract_strided_slice %1 {offsets = [0, 0, 22], sizes = [1, 8, 1], strides = [1, 1, 1]} : vector<1x8x27xf32> to vector<1x8x1xf32>
    %137 = vector.broadcast %136 : vector<1x8x1xf32> to vector<8x8x80xf32>
    %138 = vector.broadcast %135 : vector<8x1x80xf32> to vector<8x8x80xf32>
    %139 = arith.mulf %137, %138 : vector<8x8x80xf32>
    %140 = arith.addf %134, %139 : vector<8x8x80xf32>
    %141 = vector.extract_strided_slice %0 {offsets = [0, 2, 12], sizes = [8, 1, 80], strides = [1, 1, 1]} : vector<8x3x102xf32> to vector<8x1x80xf32>
    %142 = vector.extract_strided_slice %1 {offsets = [0, 0, 23], sizes = [1, 8, 1], strides = [1, 1, 1]} : vector<1x8x27xf32> to vector<1x8x1xf32>
    %143 = vector.broadcast %142 : vector<1x8x1xf32> to vector<8x8x80xf32>
    %144 = vector.broadcast %141 : vector<8x1x80xf32> to vector<8x8x80xf32>
    %145 = arith.mulf %143, %144 : vector<8x8x80xf32>
    %146 = arith.addf %140, %145 : vector<8x8x80xf32>
    %147 = vector.extract_strided_slice %0 {offsets = [0, 2, 20], sizes = [8, 1, 80], strides = [1, 1, 1]} : vector<8x3x102xf32> to vector<8x1x80xf32>
    %148 = vector.extract_strided_slice %1 {offsets = [0, 0, 24], sizes = [1, 8, 1], strides = [1, 1, 1]} : vector<1x8x27xf32> to vector<1x8x1xf32>
    %149 = vector.broadcast %148 : vector<1x8x1xf32> to vector<8x8x80xf32>
    %150 = vector.broadcast %147 : vector<8x1x80xf32> to vector<8x8x80xf32>
    %151 = arith.mulf %149, %150 : vector<8x8x80xf32>
    %152 = arith.addf %146, %151 : vector<8x8x80xf32>
    %153 = vector.extract_strided_slice %0 {offsets = [0, 2, 21], sizes = [8, 1, 80], strides = [1, 1, 1]} : vector<8x3x102xf32> to vector<8x1x80xf32>
    %154 = vector.extract_strided_slice %1 {offsets = [0, 0, 25], sizes = [1, 8, 1], strides = [1, 1, 1]} : vector<1x8x27xf32> to vector<1x8x1xf32>
    %155 = vector.broadcast %154 : vector<1x8x1xf32> to vector<8x8x80xf32>
    %156 = vector.broadcast %153 : vector<8x1x80xf32> to vector<8x8x80xf32>
    %157 = arith.mulf %155, %156 : vector<8x8x80xf32>
    %158 = arith.addf %152, %157 : vector<8x8x80xf32>
    %159 = vector.extract_strided_slice %0 {offsets = [0, 2, 22], sizes = [8, 1, 80], strides = [1, 1, 1]} : vector<8x3x102xf32> to vector<8x1x80xf32>
    %160 = vector.extract_strided_slice %1 {offsets = [0, 0, 26], sizes = [1, 8, 1], strides = [1, 1, 1]} : vector<1x8x27xf32> to vector<1x8x1xf32>
    %161 = vector.broadcast %160 : vector<1x8x1xf32> to vector<8x8x80xf32>
    %162 = vector.broadcast %159 : vector<8x1x80xf32> to vector<8x8x80xf32>
    %163 = arith.mulf %161, %162 : vector<8x8x80xf32>
    %164 = arith.addf %158, %163 : vector<8x8x80xf32>
    %c0_i32 = arith.constant 0 : i32
    %165 = arith.cmpi eq, %arg0, %c0_i32 : i32
    %166 = arith.extui %165 : i1 to i32
    %c0_i32_5 = arith.constant 0 : i32
    %167 = arith.cmpi ne, %166, %c0_i32_5 : i32
    scf.if %167 {
      %c0_i32_7 = arith.constant 0 : i32
      %171 = arith.cmpi eq, %arg1, %c0_i32_7 : i32
      %172 = arith.extui %171 : i1 to i32
      %c0_i32_8 = arith.constant 0 : i32
      %173 = arith.cmpi ne, %172, %c0_i32_8 : i32
      scf.if %173 {
        %cst_23 = arith.constant 0.000000e+00 : f32
        %193 = vector.broadcast %cst_23 : f32 to vector<1x8x2xf32>
        %c0_24 = arith.constant 0 : index
        %c0_25 = arith.constant 0 : index
        %c0_26 = arith.constant 0 : index
        %194 = vector.load %arg7[%c0_24, %c0_25, %c0_26] : memref<1x8x2xf32, #tpu.memory_space<vmem>>, vector<1x8x2xf32>
        tpu.vector_store %arg7[%c0_24, %c0_25, %c0_26], %193 {strides = array<i32>} : memref<1x8x2xf32, #tpu.memory_space<vmem>>, vector<1x8x2xf32>,
      } else {
      }
      %c0_9 = arith.constant 0 : index
      %c0_10 = arith.constant 0 : index
      %c0_11 = arith.constant 0 : index
      %174 = vector.load %arg5[%c0_9, %c0_10, %c0_11] : memref<1x1x80xf32, #tpu.memory_space<vmem>>, vector<1x1x80xf32>
      %175 = vector.broadcast %174 : vector<1x1x80xf32> to vector<8x8x80xf32>
      %176 = arith.mulf %164, %175 : vector<8x8x80xf32>
      %cst_12 = arith.constant dense<0.000000e+00> : vector<8x8xf32>
      %177 = vector.multi_reduction <add>, %176, %cst_12 [2] : vector<8x8x80xf32> to vector<8x8xf32>
      %178 = vector.shape_cast %177 : vector<8x8xf32> to vector<8x8x1xf32>
      %cst_13 = arith.constant dense<0.000000e+00> : vector<8x1xf32>
      %179 = vector.multi_reduction <add>, %178, %cst_13 [0] : vector<8x8x1xf32> to vector<8x1xf32>
      %180 = vector.shape_cast %179 : vector<8x1xf32> to vector<1x8x1xf32>
      %181 = arith.mulf %176, %164 : vector<8x8x80xf32>
      %cst_14 = arith.constant dense<0.000000e+00> : vector<8x8xf32>
      %182 = vector.multi_reduction <add>, %181, %cst_14 [2] : vector<8x8x80xf32> to vector<8x8xf32>
      %183 = vector.shape_cast %182 : vector<8x8xf32> to vector<8x8x1xf32>
      %cst_15 = arith.constant dense<0.000000e+00> : vector<8x1xf32>
      %184 = vector.multi_reduction <add>, %183, %cst_15 [0] : vector<8x8x1xf32> to vector<8x1xf32>
      %185 = vector.shape_cast %184 : vector<8x1xf32> to vector<1x8x1xf32>
      %c0_16 = arith.constant 0 : index
      %c0_17 = arith.constant 0 : index
      %c0_18 = arith.constant 0 : index
      %186 = vector.load %arg7[%c0_16, %c0_17, %c0_18] : memref<1x8x2xf32, #tpu.memory_space<vmem>>, vector<1x8x2xf32>
      %187 = tpu.concatenate %180, %185 in 2 : vector<1x8x1xf32>, vector<1x8x1xf32> -> vector<1x8x2xf32>
      %188 = arith.addf %186, %187 : vector<1x8x2xf32>
      %c0_19 = arith.constant 0 : index
      %c0_20 = arith.constant 0 : index
      %c0_21 = arith.constant 0 : index
      %189 = vector.load %arg7[%c0_19, %c0_20, %c0_21] : memref<1x8x2xf32, #tpu.memory_space<vmem>>, vector<1x8x2xf32>
      tpu.vector_store %arg7[%c0_19, %c0_20, %c0_21], %188 {strides = array<i32>} : memref<1x8x2xf32, #tpu.memory_space<vmem>>, vector<1x8x2xf32>,
      %c3_i32 = arith.constant 3 : i32
      %190 = arith.cmpi eq, %arg1, %c3_i32 : i32
      %191 = arith.extui %190 : i1 to i32
      %c0_i32_22 = arith.constant 0 : i32
      %192 = arith.cmpi ne, %191, %c0_i32_22 : i32
      scf.if %192 {
        %c0_23 = arith.constant 0 : index
        %c0_24 = arith.constant 0 : index
        %c0_25 = arith.constant 0 : index
        %193 = vector.load %arg7[%c0_23, %c0_24, %c0_25] : memref<1x8x2xf32, #tpu.memory_space<vmem>>, vector<1x8x2xf32>
        %194 = vector.extract_strided_slice %193 {offsets = [0, 0, 0], sizes = [1, 8, 1], strides = [1, 1, 1]} : vector<1x8x2xf32> to vector<1x8x1xf32>
        %cst_26 = arith.constant 4.8828125E-4 : f32
        %195 = vector.broadcast %cst_26 : f32 to vector<1x8x1xf32>
        %196 = arith.mulf %194, %195 : vector<1x8x1xf32>
        %197 = vector.extract_strided_slice %193 {offsets = [0, 0, 1], sizes = [1, 8, 1], strides = [1, 1, 1]} : vector<1x8x2xf32> to vector<1x8x1xf32>
        %cst_27 = arith.constant 4.8828125E-4 : f32
        %198 = vector.broadcast %cst_27 : f32 to vector<1x8x1xf32>
        %199 = arith.mulf %197, %198 : vector<1x8x1xf32>
        %200 = arith.mulf %196, %196 : vector<1x8x1xf32>
        %201 = arith.subf %199, %200 : vector<1x8x1xf32>
        %cst_28 = arith.constant 0.000000e+00 : f32
        %202 = vector.broadcast %cst_28 : f32 to vector<1x8x1xf32>
        %203 = arith.maximumf %201, %202 : vector<1x8x1xf32>
        %c0_29 = arith.constant 0 : index
        %c0_30 = arith.constant 0 : index
        %c0_31 = arith.constant 0 : index
        %204 = vector.load %arg4[%c0_29, %c0_30, %c0_31] : memref<1x8x2xf32, #tpu.memory_space<vmem>>, vector<1x8x1xf32>
        %cst_32 = arith.constant 9.99999974E-6 : f32
        %205 = vector.broadcast %cst_32 : f32 to vector<1x8x1xf32>
        %206 = arith.addf %203, %205 : vector<1x8x1xf32>
        %207 = math.rsqrt %206 : vector<1x8x1xf32>
        %208 = arith.mulf %204, %207 : vector<1x8x1xf32>
        %c0_33 = arith.constant 0 : index
        %c0_34 = arith.constant 0 : index
        %c1 = arith.constant 1 : index
        %209 = vector.load %arg4[%c0_33, %c0_34, %c1] : memref<1x8x2xf32, #tpu.memory_space<vmem>>, vector<1x8x1xf32>
        %210 = arith.mulf %196, %208 : vector<1x8x1xf32>
        %211 = arith.subf %209, %210 : vector<1x8x1xf32>
        %212 = tpu.concatenate %208, %211 in 2 : vector<1x8x1xf32>, vector<1x8x1xf32> -> vector<1x8x2xf32>
        %c0_35 = arith.constant 0 : index
        %c0_36 = arith.constant 0 : index
        %c0_37 = arith.constant 0 : index
        %213 = vector.load %arg7[%c0_35, %c0_36, %c0_37] : memref<1x8x2xf32, #tpu.memory_space<vmem>>, vector<1x8x2xf32>
        tpu.vector_store %arg7[%c0_35, %c0_36, %c0_37], %212 {strides = array<i32>} : memref<1x8x2xf32, #tpu.memory_space<vmem>>, vector<1x8x2xf32>,
      } else {
      }
    } else {
    }
    %c1_i32 = arith.constant 1 : i32
    %168 = arith.cmpi eq, %arg0, %c1_i32 : i32
    %169 = arith.extui %168 : i1 to i32
    %c0_i32_6 = arith.constant 0 : i32
    %170 = arith.cmpi ne, %169, %c0_i32_6 : i32
    scf.if %170 {
      %c0_7 = arith.constant 0 : index
      %c0_8 = arith.constant 0 : index
      %c0_9 = arith.constant 0 : index
      %171 = vector.load %arg7[%c0_7, %c0_8, %c0_9] : memref<1x8x2xf32, #tpu.memory_space<vmem>>, vector<1x8x2xf32>
      %172 = vector.extract_strided_slice %171 {offsets = [0, 0, 0], sizes = [1, 8, 1], strides = [1, 1, 1]} : vector<1x8x2xf32> to vector<1x8x1xf32>
      %173 = vector.broadcast %172 : vector<1x8x1xf32> to vector<8x8x80xf32>
      %174 = arith.mulf %164, %173 : vector<8x8x80xf32>
      %175 = vector.extract_strided_slice %171 {offsets = [0, 0, 1], sizes = [1, 8, 1], strides = [1, 1, 1]} : vector<1x8x2xf32> to vector<1x8x1xf32>
      %176 = vector.broadcast %175 : vector<1x8x1xf32> to vector<8x8x80xf32>
      %177 = arith.addf %174, %176 : vector<8x8x80xf32>
      %178 = vector.extract_strided_slice %177 {offsets = [0, 0, 0], sizes = [8, 4, 80], strides = [1, 1, 1]} : vector<8x8x80xf32> to vector<8x4x80xf32>
      %179 = vector.extract_strided_slice %177 {offsets = [0, 4, 0], sizes = [8, 4, 80], strides = [1, 1, 1]} : vector<8x8x80xf32> to vector<8x4x80xf32>
      %180 = arith.addf %178, %179 : vector<8x4x80xf32>
      %c0_10 = arith.constant 0 : index
      %c0_11 = arith.constant 0 : index
      %c0_12 = arith.constant 0 : index
      %181 = vector.load %arg6[%c0_10, %c0_11, %c0_12] : memref<8x4x80xf32, #tpu.memory_space<vmem>>, vector<8x4x80xf32>
      tpu.vector_store %arg6[%c0_10, %c0_11, %c0_12], %180 {strides = array<i32>} : memref<8x4x80xf32, #tpu.memory_space<vmem>>, vector<8x4x80xf32>,
    } else {
    }
    return
  }
  func.func @transform_0(%arg0: i32, %arg1: i32) -> (i32, i32, i32) {
    %c0_i32 = arith.constant 0 : i32
    %c0_i32_0 = arith.constant 0 : i32
    %c0_i32_1 = arith.constant 0 : i32
    return %arg1, %c0_i32, %c0_i32_0 : i32, i32, i32
  }
  func.func @transform_1(%arg0: i32, %arg1: i32) -> (i32, i32, i32) {
    %c0_i32 = arith.constant 0 : i32
    %c0_i32_0 = arith.constant 0 : i32
    %c0_i32_1 = arith.constant 0 : i32
    %c0_i32_2 = arith.constant 0 : i32
    return %c0_i32, %c0_i32_0, %c0_i32_1 : i32, i32, i32
  }
  func.func @transform_2(%arg0: i32, %arg1: i32) -> (i32, i32, i32) {
    %c0_i32 = arith.constant 0 : i32
    %c0_i32_0 = arith.constant 0 : i32
    %c0_i32_1 = arith.constant 0 : i32
    %c0_i32_2 = arith.constant 0 : i32
    return %c0_i32, %c0_i32_0, %c0_i32_1 : i32, i32, i32
  }
  func.func @transform_3(%arg0: i32, %arg1: i32) -> (i32, i32, i32) {
    %c0_i32 = arith.constant 0 : i32
    %c0_i32_0 = arith.constant 0 : i32
    %c0_i32_1 = arith.constant 0 : i32
    %c0_i32_2 = arith.constant 0 : i32
    return %c0_i32, %c0_i32_0, %c0_i32_1 : i32, i32, i32
  }
  func.func @transform_4(%arg0: i32, %arg1: i32) -> (i32, i32, i32) {
    %0 = arith.muli %arg1, %arg0 : i32
    %c0_i32 = arith.constant 0 : i32
    %c0_i32_0 = arith.constant 0 : i32
    %c0_i32_1 = arith.constant 0 : i32
    return %0, %c0_i32, %c0_i32_0 : i32, i32, i32
  }
}

</mosaic_0001>

<llo_original>
// kernel: model_forward.1
$region0: #{model_forward.1}
  #allocation0 [shape = 'u32[]', space=smem, size = 0x4, offset = 0x4, fixed_abs, tag = 'smem constant byte address 0x4 - core index']
  #allocation1 [shape = 'u32[144,128]{1,0:T(1,128)}', space=vmem, size = 0x12000, scoped, tag = 'internal scratch']
  #allocation2 [shape = 'f32[1,8,2]{2,1,0:T(8,128)}', space=vmem, size = 0x1000, scoped, tag = 'scratch operand']
  %s0 = inlined_call_operand.vmem [shape: f32[32,3,102], index: 0, kind: input, shape index: {}]
  %s1 = inlined_call_operand.vmem [shape: f32[1,8,27], index: 1, kind: input, shape index: {}]
  %s2 = inlined_call_operand.vmem [shape: f32[1,8,2], index: 2, kind: input, shape index: {}]
  %s3 = inlined_call_operand.vmem [shape: f32[1,1,80], index: 3, kind: input, shape index: {}]
  %s4 = inlined_call_operand.vmem [shape: f32[32,4,80], index: 4, kind: output, shape index: {}]
  %s5 = sld [smem:[#allocation0]]
  $region65: #{model_forward.1} parent=0
    _
  %s7 = ssub.s32 1, %s5
  %s8 = scalar_select 0, %s7, %s5
  loop: start=0, step=1, limit=10
  $region2: #{model_forward.1} parent=0 // loop_pre_header
    _
  $region3: #{model_forward.1} parent=0 // loop_header
    %s10 = sphi 0, %s14
    %p11 = scmp.ge.s32.totalorder %s10, 10
    %s17 = sphi 0, %s29
    %s18 = sphi 0, %s25
    %s19 = sphi 0, %s17
    %s20 = sphi 0, %s18
    %s21 = sphi 0, %s19
    %s22 = sphi 0, %s20
    %s32 = sphi 0, %s34
    %s35 = sphi 0, %s32
    %s36 = sphi 0, %s35
    %s52 = sphi 0, %s36
    %s56 = sphi 0, %s56
    %s58 = sphi 0, %s56
    %s59 = sphi 0, %s58
    %s73 = sphi 0, %s59
    %s77 = sphi 0, %s77
    %s79 = sphi 0, %s77
    %s80 = sphi 0, %s79
    %s94 = sphi 0, %s80
    %s98 = sphi 0, %s98
    %s100 = sphi 0, %s98
    %s101 = sphi 0, %s100
    %s115 = sphi 0, %s101
    %s123 = sphi 0, %s125
    %s126 = sphi 0, %s123
    %s127 = sphi 0, %s126
    %s143 = sphi 0, %s127
  $region4: #{model_forward.1} parent=0 // loop_header_branch
    %13 = sbr.rel (%p11) target = $region8
  $region5: #{model_forward.1} parent=0 // loop_body
    %s15 = ssub.s32 %s10, 1
    %s16 = ssub.s32 %s10, 2
    %s23 = sadd.s32 1, %s18
    %p24 = scmp.ge.s32.totalorder %s23, 4
    %s25 = scalar_select %p24, 0, %s23
    %s26 = sadd.s32 1, %s17
    %s27 = scalar_select %p24, %s26, %s17
    %p28 = scmp.ge.s32.totalorder %s27, 2
    %s29 = scalar_select %p28, 0, %s27
    %s30 = ssub.s32 %s18, %s25
    %p31 = scmp.eq.s32.totalorder %s30, 0
    %s33 = sadd.s32 %s32, 1
    %s34 = scalar_select %p31, %s32, %s33
    %p37 = pneg %p31
    %p38 = scmp.eq.s32.totalorder %s10, 7
    %p39 = por %p37, %p38
    %p40 = scmp.ne.s32.totalorder %s32, %s35
    %p41 = scmp.eq.s32.totalorder %s10, 0
    %p42 = por %p40, %p41
    %p43 = scmp.ne.s32.totalorder %s32, %s35
    %p44 = scmp.eq.s32.totalorder %s15, 7
    %p45 = por %p43, %p44
    %p46 = scmp.ne.s32.totalorder %s35, %s36
    %p47 = scmp.eq.s32.totalorder %s15, 0
    %p48 = por %p46, %p47
    %p49 = scmp.ne.s32.totalorder %s35, %s36
    %p50 = scmp.eq.s32.totalorder %s16, 7
    %p51 = por %p49, %p50
    %p53 = scmp.ne.s32.totalorder %s36, %s52
    %p54 = scmp.eq.s32.totalorder %s16, 0
    %p55 = por %p53, %p54
    %s57 = sadd.s32 %s56, 1
    %p60 = scmp.eq.s32.totalorder %s10, 7
    %p61 = scmp.ne.s32.totalorder %s56, %s58
    %p62 = scmp.eq.s32.totalorder %s10, 0
    %p63 = por %p61, %p62
    %p64 = scmp.ne.s32.totalorder %s56, %s58
    %p65 = scmp.eq.s32.totalorder %s15, 7
    %p66 = por %p64, %p65
    %p67 = scmp.ne.s32.totalorder %s58, %s59
    %p68 = scmp.eq.s32.totalorder %s15, 0
    %p69 = por %p67, %p68
    %p70 = scmp.ne.s32.totalorder %s58, %s59
    %p71 = scmp.eq.s32.totalorder %s16, 7
    %p72 = por %p70, %p71
    %p74 = scmp.ne.s32.totalorder %s59, %s73
    %p75 = scmp.eq.s32.totalorder %s16, 0
    %p76 = por %p74, %p75
    %s78 = sadd.s32 %s77, 1
    %p81 = scmp.eq.s32.totalorder %s10, 7
    %p82 = scmp.ne.s32.totalorder %s77, %s79
    %p83 = scmp.eq.s32.totalorder %s10, 0
    %p84 = por %p82, %p83
    %p85 = scmp.ne.s32.totalorder %s77, %s79
    %p86 = scmp.eq.s32.totalorder %s15, 7
    %p87 = por %p85, %p86
    %p88 = scmp.ne.s32.totalorder %s79, %s80
    %p89 = scmp.eq.s32.totalorder %s15, 0
    %p90 = por %p88, %p89
    %p91 = scmp.ne.s32.totalorder %s79, %s80
    %p92 = scmp.eq.s32.totalorder %s16, 7
    %p93 = por %p91, %p92
    %p95 = scmp.ne.s32.totalorder %s80, %s94
    %p96 = scmp.eq.s32.totalorder %s16, 0
    %p97 = por %p95, %p96
    %s99 = sadd.s32 %s98, 1
    %p102 = scmp.eq.s32.totalorder %s10, 7
    %p103 = scmp.ne.s32.totalorder %s98, %s100
    %p104 = scmp.eq.s32.totalorder %s10, 0
    %p105 = por %p103, %p104
    %p106 = scmp.ne.s32.totalorder %s98, %s100
    %p107 = scmp.eq.s32.totalorder %s15, 7
    %p108 = por %p106, %p107
    %p109 = scmp.ne.s32.totalorder %s100, %s101
    %p110 = scmp.eq.s32.totalorder %s15, 0
    %p111 = por %p109, %p110
    %p112 = scmp.ne.s32.totalorder %s100, %s101
    %p113 = scmp.eq.s32.totalorder %s16, 7
    %p114 = por %p112, %p113
    %p116 = scmp.ne.s32.totalorder %s101, %s115
    %p117 = scmp.eq.s32.totalorder %s16, 0
    %p118 = por %p116, %p117
    %s119 = smul.u32 %s18, %s17
    %s120 = smul.u32 %s25, %s29
    %s121 = ssub.s32 %s119, %s120
    %p122 = scmp.eq.s32.totalorder %s121, 0
    %s124 = sadd.s32 %s123, 1
    %s125 = scalar_select %p122, %s123, %s124
    %p128 = pneg %p122
    %p129 = scmp.eq.s32.totalorder %s10, 7
    %p130 = por %p128, %p129
    %p131 = scmp.ne.s32.totalorder %s123, %s126
    %p132 = scmp.eq.s32.totalorder %s10, 0
    %p133 = por %p131, %p132
    %p134 = scmp.ne.s32.totalorder %s123, %s126
    %p135 = scmp.eq.s32.totalorder %s15, 7
    %p136 = por %p134, %p135
    %p137 = scmp.ne.s32.totalorder %s126, %s127
    %p138 = scmp.eq.s32.totalorder %s15, 0
    %p139 = por %p137, %p138
    %p140 = scmp.ne.s32.totalorder %s126, %s127
    %p141 = scmp.eq.s32.totalorder %s16, 7
    %p142 = por %p140, %p141
    %p144 = scmp.ne.s32.totalorder %s127, %s143
    %p145 = scmp.eq.s32.totalorder %s16, 0
    %p146 = por %p144, %p145
    %p147 = scmp.le.s32.totalorder 1, %s10
    %p148 = scmp.lt.s32.totalorder %s10, 9
    %p149 = pnand %p147, %p148
    %p150 = pneg %p149
    // Predicated region
    $region9: #{model_forward.1} parent=5 // pred_check
      _
    $region10: #{model_forward.1} parent=5 // pred_check_branch
      %152 = sbr.rel (%p149) target = $region12
    $region11: #{model_forward.1} parent=5 // pred_region
      %s153 = ssub.s32 %s10, 1
      // Predicated region
      $region13: #{model_forward.1} parent=11 // pred_check
        %p154 = pneg %p69
      $region14: #{model_forward.1} parent=11 // pred_check_branch
        %156 = sbr.rel (%p154) target = $region16
      $region15: #{model_forward.1} parent=11 // pred_region
        _
      $region16: #{model_forward.1} parent=11 // pred_fallthru
        _
      // Predicated region
      $region17: #{model_forward.1} parent=11 // pred_check
        %p157 = pneg %p90
      $region18: #{model_forward.1} parent=11 // pred_check_branch
        %159 = sbr.rel (%p157) target = $region20
      $region19: #{model_forward.1} parent=11 // pred_region
        _
      $region20: #{model_forward.1} parent=11 // pred_fallthru
        _
      // Predicated region
      $region21: #{model_forward.1} parent=11 // pred_check
        %p160 = pneg %p111
      $region22: #{model_forward.1} parent=11 // pred_check_branch
        %162 = sbr.rel (%p160) target = $region24
      $region23: #{model_forward.1} parent=11 // pred_region
        _
      $region24: #{model_forward.1} parent=11 // pred_fallthru
        _
    $region12: #{model_forward.1} parent=5 // pred_fallthru
      _
    %p163 = scmp.lt.s32.totalorder %s10, 8
    // Predicated region
    $region25: #{model_forward.1} parent=5 // pred_check
      %p164 = pneg %p163
    $region26: #{model_forward.1} parent=5 // pred_check_branch
      %166 = sbr.rel (%p164) target = $region28
    $region27: #{model_forward.1} parent=5 // pred_region
      // Predicated region
      $region29: #{model_forward.1} parent=27 // pred_check
        %p167 = pneg %p42
      $region30: #{model_forward.1} parent=27 // pred_check_branch
        %169 = sbr.rel (%p167) target = $region32
      $region31: #{model_forward.1} parent=27 // pred_region
        %s170 = smul.u32 8, %s18
        %p171 = scmp.lt.s32.totalorder %s170, 31
        %s172 = scalar_select %p171, %s170, 31
        %s173 = smul.addr %s172, 4
        %s174 = scalar_lea.vmem %s0, %s173
        %s175 = smul.u32 8, %s18
      $region32: #{model_forward.1} parent=27 // pred_fallthru
        _
    $region28: #{model_forward.1} parent=5 // pred_fallthru
      _
    %p176 = scmp.le.s32.totalorder 1, %s10
    %p177 = scmp.lt.s32.totalorder %s10, 9
    %p178 = pnand %p176, %p177
    %p179 = pneg %p178
    // Predicated region
    $region33: #{model_forward.1} parent=5 // pred_check
      _
    $region34: #{model_forward.1} parent=5 // pred_check_branch
      %181 = sbr.rel (%p178) target = $region36
    $region35: #{model_forward.1} parent=5 // pred_region
      %s182 = ssub.s32 %s10, 1
      %s183 = smul.u32 8, %s20
      %p184 = scmp.lt.s32.totalorder %s183, 31
      %s185 = scalar_select %p184, %s183, 31
      %s186 = smul.addr %s185, 4
      %s187 = scalar_lea.vmem %s0, %s186
      %p188 = pneg %p48
      %p189 = pneg %p45
      %p190 = pneg %p69
      %p191 = pneg %p66
      %p192 = pneg %p90
      %p193 = pneg %p87
      %p194 = pneg %p111
      %p195 = pneg %p108
      %p196 = pneg %p139
      %p197 = pneg %p136
      %s198 = smul.u32 %s20, %s19
      %s199 = smul.u32 8, %s198
      %p200 = scmp.lt.s32.totalorder %s199, 31
      %s201 = scalar_select %p200, %s199, 31
      %s202 = smul.addr %s201, 4
      %s203 = scalar_lea.vmem %s4, %s202
      %s204 = smul.u32 8, %s20
      %p205 = scmp.lt.s32.totalorder %s204, 31
      %s206 = scalar_select %p205, %s204, 31
      %s207 = smul.addr %s206, 4
      %s208 = scalar_lea.vmem %s0, %s207
      %s209 = smul.u32 8, %s20
      %s210 = smul.u32 %s20, %s19
      %s211 = smul.u32 8, %s210
      %p212 = scmp.lt.s32.totalorder %s211, 31
      %s213 = scalar_select %p212, %s211, 31
      %s214 = smul.addr %s213, 4
      %s215 = scalar_lea.vmem %s4, %s214
      %s216 = smul.u32 %s20, %s19
      %s217 = smul.u32 8, %s216
      %v218 = vld [vmem:[%s208] sm:$0x7]
      %v219 = vld [vmem:[%s208 + $0x4] sm:$0x7]
      %v220 = vld [vmem:[%s208 + $0x8] sm:$0x7]
      %v221 = vld [vmem:[%s208 + $0xc] sm:$0x7]
      %v222 = vld [vmem:[%s208 + $0x10] sm:$0x7]
      %v223 = vld [vmem:[%s208 + $0x14] sm:$0x7]
      %v224 = vld [vmem:[%s208 + $0x18] sm:$0x7]
      %v225 = vld [vmem:[%s208 + $0x1c] sm:$0x7]
      %v226 = vld [vmem:[%s1] sm:$0xff]
      %228 = vset.pattern.permute.xlu0 0
      %229 = vperm.xlu0 %228, %v226
      %v230 = vpop.permute.xlu0 %229
      %v232 = vlaneseq
      %v233 = vshrl.u32 %v232, 7
      %v234 = vsub.s32 0, %v233
      %v235 = vrot.slane %v218, %v234
      %v236 = vlaneseq
      %v237 = vshrl.u32 %v236, 7
      %v238 = vsub.s32 0, %v237
      %v239 = vrot.slane %v219, %v238
      %v240 = vlaneseq
      %v241 = vshrl.u32 %v240, 7
      %v242 = vsub.s32 0, %v241
      %v243 = vrot.slane %v220, %v242
      %v244 = vlaneseq
      %v245 = vshrl.u32 %v244, 7
      %v246 = vsub.s32 0, %v245
      %v247 = vrot.slane %v221, %v246
      %v248 = vlaneseq
      %v249 = vshrl.u32 %v248, 7
      %v250 = vsub.s32 0, %v249
      %v251 = vrot.slane %v222, %v250
      %v252 = vlaneseq
      %v253 = vshrl.u32 %v252, 7
      %v254 = vsub.s32 0, %v253
      %v255 = vrot.slane %v223, %v254
      %v256 = vlaneseq
      %v257 = vshrl.u32 %v256, 7
      %v258 = vsub.s32 0, %v257
      %v259 = vrot.slane %v224, %v258
      %v260 = vlaneseq
      %v261 = vshrl.u32 %v260, 7
      %v262 = vsub.s32 0, %v261
      %v263 = vrot.slane %v225, %v262
      %v264 = vmul.f32 %v230, %v235
      %v265 = vmul.f32 %v230, %v239
      %v266 = vmul.f32 %v230, %v243
      %v267 = vmul.f32 %v230, %v247
      %v268 = vmul.f32 %v230, %v251
      %v269 = vmul.f32 %v230, %v255
      %v270 = vmul.f32 %v230, %v259
      %v271 = vmul.f32 %v230, %v263
      %v272 = vadd.f32 %v264, 0.0
      %v273 = vadd.f32 %v265, 0.0
      %v274 = vadd.f32 %v266, 0.0
      %v275 = vadd.f32 %v267, 0.0
      %v276 = vadd.f32 %v268, 0.0
      %v277 = vadd.f32 %v269, 0.0
      %v278 = vadd.f32 %v270, 0.0
      %v279 = vadd.f32 %v271, 0.0
      %280 = vset.pattern.permute.xlu0 1
      %281 = vperm.xlu0 %280, %v226
      %v282 = vpop.permute.xlu0 %281
      %v284 = vmul.f32 %v282, %v235
      %v285 = vmul.f32 %v282, %v239
      %v286 = vmul.f32 %v282, %v243
      %v287 = vmul.f32 %v282, %v247
      %v288 = vmul.f32 %v282, %v251
      %v289 = vmul.f32 %v282, %v255
      %v290 = vmul.f32 %v282, %v259
      %v291 = vmul.f32 %v282, %v263
      %300 = vrot.lane.b32.xlu0 %v284, 127
      %v301 = vpop.permute.xlu0 %300
      %302 = vrot.lane.b32.xlu0 %v285, 127
      %v303 = vpop.permute.xlu0 %302
      %304 = vrot.lane.b32.xlu0 %v286, 127
      %v305 = vpop.permute.xlu0 %304
      %306 = vrot.lane.b32.xlu0 %v287, 127
      %v307 = vpop.permute.xlu0 %306
      %308 = vrot.lane.b32.xlu0 %v288, 127
      %v309 = vpop.permute.xlu0 %308
      %310 = vrot.lane.b32.xlu0 %v289, 127
      %v311 = vpop.permute.xlu0 %310
      %312 = vrot.lane.b32.xlu0 %v290, 127
      %v313 = vpop.permute.xlu0 %312
      %314 = vrot.lane.b32.xlu0 %v291, 127
      %v315 = vpop.permute.xlu0 %314
      %v324 = vadd.f32 %v272, %v301
      %v325 = vadd.f32 %v273, %v303
      %v326 = vadd.f32 %v274, %v305
      %v327 = vadd.f32 %v275, %v307
      %v328 = vadd.f32 %v276, %v309
      %v329 = vadd.f32 %v277, %v311
      %v330 = vadd.f32 %v278, %v313
      %v331 = vadd.f32 %v279, %v315
      %332 = vset.pattern.permute.xlu0 2
      %333 = vperm.xlu0 %332, %v226
      %v334 = vpop.permute.xlu0 %333
      %v336 = vmul.f32 %v334, %v235
      %v337 = vmul.f32 %v334, %v239
      %v338 = vmul.f32 %v334, %v243
      %v339 = vmul.f32 %v334, %v247
      %v340 = vmul.f32 %v334, %v251
      %v341 = vmul.f32 %v334, %v255
      %v342 = vmul.f32 %v334, %v259
      %v343 = vmul.f32 %v334, %v263
      %352 = vrot.lane.b32.xlu0 %v336, 126
      %v353 = vpop.permute.xlu0 %352
      %354 = vrot.lane.b32.xlu0 %v337, 126
      %v355 = vpop.permute.xlu0 %354
      %356 = vrot.lane.b32.xlu0 %v338, 126
      %v357 = vpop.permute.xlu0 %356
      %358 = vrot.lane.b32.xlu0 %v339, 126
      %v359 = vpop.permute.xlu0 %358
      %360 = vrot.lane.b32.xlu0 %v340, 126
      %v361 = vpop.permute.xlu0 %360
      %362 = vrot.lane.b32.xlu0 %v341, 126
      %v363 = vpop.permute.xlu0 %362
      %364 = vrot.lane.b32.xlu0 %v342, 126
      %v365 = vpop.permute.xlu0 %364
      %366 = vrot.lane.b32.xlu0 %v343, 126
      %v367 = vpop.permute.xlu0 %366
      %v376 = vadd.f32 %v324, %v353
      %v377 = vadd.f32 %v325, %v355
      %v378 = vadd.f32 %v326, %v357
      %v379 = vadd.f32 %v327, %v359
      %v380 = vadd.f32 %v328, %v361
      %v381 = vadd.f32 %v329, %v363
      %v382 = vadd.f32 %v330, %v365
      %v383 = vadd.f32 %v331, %v367
      %384 = vset.pattern.permute.xlu0 3
      %385 = vperm.xlu0 %384, %v226
      %v386 = vpop.permute.xlu0 %385
      %v388 = vmul.f32 %v386, %v235
      %v389 = vmul.f32 %v386, %v239
      %v390 = vmul.f32 %v386, %v243
      %v391 = vmul.f32 %v386, %v247
      %v392 = vmul.f32 %v386, %v251
      %v393 = vmul.f32 %v386, %v255
      %v394 = vmul.f32 %v386, %v259
      %v395 = vmul.f32 %v386, %v263
      %404 = vrot.lane.b32.xlu0 %v388, 118
      %v405 = vpop.permute.xlu0 %404
      %406 = vrot.lane.b32.xlu0 %v389, 118
      %v407 = vpop.permute.xlu0 %406
      %408 = vrot.lane.b32.xlu0 %v390, 118
      %v409 = vpop.permute.xlu0 %408
      %410 = vrot.lane.b32.xlu0 %v391, 118
      %v411 = vpop.permute.xlu0 %410
      %412 = vrot.lane.b32.xlu0 %v392, 118
      %v413 = vpop.permute.xlu0 %412
      %414 = vrot.lane.b32.xlu0 %v393, 118
      %v415 = vpop.permute.xlu0 %414
      %416 = vrot.lane.b32.xlu0 %v394, 118
      %v417 = vpop.permute.xlu0 %416
      %418 = vrot.lane.b32.xlu0 %v395, 118
      %v419 = vpop.permute.xlu0 %418
      %v428 = vadd.f32 %v376, %v405
      %v429 = vadd.f32 %v377, %v407
      %v430 = vadd.f32 %v378, %v409
      %v431 = vadd.f32 %v379, %v411
      %v432 = vadd.f32 %v380, %v413
      %v433 = vadd.f32 %v381, %v415
      %v434 = vadd.f32 %v382, %v417
      %v435 = vadd.f32 %v383, %v419
      %436 = vset.pattern.permute.xlu0 4
      %437 = vperm.xlu0 %436, %v226
      %v438 = vpop.permute.xlu0 %437
      %v440 = vmul.f32 %v438, %v235
      %v441 = vmul.f32 %v438, %v239
      %v442 = vmul.f32 %v438, %v243
      %v443 = vmul.f32 %v438, %v247
      %v444 = vmul.f32 %v438, %v251
      %v445 = vmul.f32 %v438, %v255
      %v446 = vmul.f32 %v438, %v259
      %v447 = vmul.f32 %v438, %v263
      %456 = vrot.lane.b32.xlu0 %v440, 117
      %v457 = vpop.permute.xlu0 %456
      %458 = vrot.lane.b32.xlu0 %v441, 117
      %v459 = vpop.permute.xlu0 %458
      %460 = vrot.lane.b32.xlu0 %v442, 117
      %v461 = vpop.permute.xlu0 %460
      %462 = vrot.lane.b32.xlu0 %v443, 117
      %v463 = vpop.permute.xlu0 %462
      %464 = vrot.lane.b32.xlu0 %v444, 117
      %v465 = vpop.permute.xlu0 %464
      %466 = vrot.lane.b32.xlu0 %v445, 117
      %v467 = vpop.permute.xlu0 %466
      %468 = vrot.lane.b32.xlu0 %v446, 117
      %v469 = vpop.permute.xlu0 %468
      %470 = vrot.lane.b32.xlu0 %v447, 117
      %v471 = vpop.permute.xlu0 %470
      %v480 = vadd.f32 %v428, %v457
      %v481 = vadd.f32 %v429, %v459
      %v482 = vadd.f32 %v430, %v461
      %v483 = vadd.f32 %v431, %v463
      %v484 = vadd.f32 %v432, %v465
      %v485 = vadd.f32 %v433, %v467
      %v486 = vadd.f32 %v434, %v469
      %v487 = vadd.f32 %v435, %v471
      %488 = vset.pattern.permute.xlu0 5
      %489 = vperm.xlu0 %488, %v226
      %v490 = vpop.permute.xlu0 %489
      %v492 = vmul.f32 %v490, %v235
      %v493 = vmul.f32 %v490, %v239
      %v494 = vmul.f32 %v490, %v243
      %v495 = vmul.f32 %v490, %v247
      %v496 = vmul.f32 %v490, %v251
      %v497 = vmul.f32 %v490, %v255
      %v498 = vmul.f32 %v490, %v259
      %v499 = vmul.f32 %v490, %v263
      %508 = vrot.lane.b32.xlu0 %v492, 116
      %v509 = vpop.permute.xlu0 %508
      %510 = vrot.lane.b32.xlu0 %v493, 116
      %v511 = vpop.permute.xlu0 %510
      %512 = vrot.lane.b32.xlu0 %v494, 116
      %v513 = vpop.permute.xlu0 %512
      %514 = vrot.lane.b32.xlu0 %v495, 116
      %v515 = vpop.permute.xlu0 %514
      %516 = vrot.lane.b32.xlu0 %v496, 116
      %v517 = vpop.permute.xlu0 %516
      %518 = vrot.lane.b32.xlu0 %v497, 116
      %v519 = vpop.permute.xlu0 %518
      %520 = vrot.lane.b32.xlu0 %v498, 116
      %v521 = vpop.permute.xlu0 %520
      %522 = vrot.lane.b32.xlu0 %v499, 116
      %v523 = vpop.permute.xlu0 %522
      %v532 = vadd.f32 %v480, %v509
      %v533 = vadd.f32 %v481, %v511
      %v534 = vadd.f32 %v482, %v513
      %v535 = vadd.f32 %v483, %v515
      %v536 = vadd.f32 %v484, %v517
      %v537 = vadd.f32 %v485, %v519
      %v538 = vadd.f32 %v486, %v521
      %v539 = vadd.f32 %v487, %v523
      %540 = vset.pattern.permute.xlu0 6
      %541 = vperm.xlu0 %540, %v226
      %v542 = vpop.permute.xlu0 %541
      %v544 = vmul.f32 %v542, %v235
      %v545 = vmul.f32 %v542, %v239
      %v546 = vmul.f32 %v542, %v243
      %v547 = vmul.f32 %v542, %v247
      %v548 = vmul.f32 %v542, %v251
      %v549 = vmul.f32 %v542, %v255
      %v550 = vmul.f32 %v542, %v259
      %v551 = vmul.f32 %v542, %v263
      %560 = vrot.lane.b32.xlu0 %v544, 108
      %v561 = vpop.permute.xlu0 %560
      %562 = vrot.lane.b32.xlu0 %v545, 108
      %v563 = vpop.permute.xlu0 %562
      %564 = vrot.lane.b32.xlu0 %v546, 108
      %v565 = vpop.permute.xlu0 %564
      %566 = vrot.lane.b32.xlu0 %v547, 108
      %v567 = vpop.permute.xlu0 %566
      %568 = vrot.lane.b32.xlu0 %v548, 108
      %v569 = vpop.permute.xlu0 %568
      %570 = vrot.lane.b32.xlu0 %v549, 108
      %v571 = vpop.permute.xlu0 %570
      %572 = vrot.lane.b32.xlu0 %v550, 108
      %v573 = vpop.permute.xlu0 %572
      %574 = vrot.lane.b32.xlu0 %v551, 108
      %v575 = vpop.permute.xlu0 %574
      %v584 = vadd.f32 %v532, %v561
      %v585 = vadd.f32 %v533, %v563
      %v586 = vadd.f32 %v534, %v565
      %v587 = vadd.f32 %v535, %v567
      %v588 = vadd.f32 %v536, %v569
      %v589 = vadd.f32 %v537, %v571
      %v590 = vadd.f32 %v538, %v573
      %v591 = vadd.f32 %v539, %v575
      %592 = vset.pattern.permute.xlu0 7
      %593 = vperm.xlu0 %592, %v226
      %v594 = vpop.permute.xlu0 %593
      %v596 = vmul.f32 %v594, %v235
      %v597 = vmul.f32 %v594, %v239
      %v598 = vmul.f32 %v594, %v243
      %v599 = vmul.f32 %v594, %v247
      %v600 = vmul.f32 %v594, %v251
      %v601 = vmul.f32 %v594, %v255
      %v602 = vmul.f32 %v594, %v259
      %v603 = vmul.f32 %v594, %v263
      %612 = vrot.lane.b32.xlu0 %v596, 107
      %v613 = vpop.permute.xlu0 %612
      %614 = vrot.lane.b32.xlu0 %v597, 107
      %v615 = vpop.permute.xlu0 %614
      %616 = vrot.lane.b32.xlu0 %v598, 107
      %v617 = vpop.permute.xlu0 %616
      %618 = vrot.lane.b32.xlu0 %v599, 107
      %v619 = vpop.permute.xlu0 %618
      %620 = vrot.lane.b32.xlu0 %v600, 107
      %v621 = vpop.permute.xlu0 %620
      %622 = vrot.lane.b32.xlu0 %v601, 107
      %v623 = vpop.permute.xlu0 %622
      %624 = vrot.lane.b32.xlu0 %v602, 107
      %v625 = vpop.permute.xlu0 %624
      %626 = vrot.lane.b32.xlu0 %v603, 107
      %v627 = vpop.permute.xlu0 %626
      %v636 = vadd.f32 %v584, %v613
      %v637 = vadd.f32 %v585, %v615
      %v638 = vadd.f32 %v586, %v617
      %v639 = vadd.f32 %v587, %v619
      %v640 = vadd.f32 %v588, %v621
      %v641 = vadd.f32 %v589, %v623
      %v642 = vadd.f32 %v590, %v625
      %v643 = vadd.f32 %v591, %v627
      %644 = vset.pattern.permute.xlu0 8
      %645 = vperm.xlu0 %644, %v226
      %v646 = vpop.permute.xlu0 %645
      %v648 = vmul.f32 %v646, %v235
      %v649 = vmul.f32 %v646, %v239
      %v650 = vmul.f32 %v646, %v243
      %v651 = vmul.f32 %v646, %v247
      %v652 = vmul.f32 %v646, %v251
      %v653 = vmul.f32 %v646, %v255
      %v654 = vmul.f32 %v646, %v259
      %v655 = vmul.f32 %v646, %v263
      %664 = vrot.lane.b32.xlu0 %v648, 106
      %v665 = vpop.permute.xlu0 %664
      %666 = vrot.lane.b32.xlu0 %v649, 106
      %v667 = vpop.permute.xlu0 %666
      %668 = vrot.lane.b32.xlu0 %v650, 106
      %v669 = vpop.permute.xlu0 %668
      %670 = vrot.lane.b32.xlu0 %v651, 106
      %v671 = vpop.permute.xlu0 %670
      %672 = vrot.lane.b32.xlu0 %v652, 106
      %v673 = vpop.permute.xlu0 %672
      %674 = vrot.lane.b32.xlu0 %v653, 106
      %v675 = vpop.permute.xlu0 %674
      %676 = vrot.lane.b32.xlu0 %v654, 106
      %v677 = vpop.permute.xlu0 %676
      %678 = vrot.lane.b32.xlu0 %v655, 106
      %v679 = vpop.permute.xlu0 %678
      %v688 = vadd.f32 %v636, %v665
      %v689 = vadd.f32 %v637, %v667
      %v690 = vadd.f32 %v638, %v669
      %v691 = vadd.f32 %v639, %v671
      %v692 = vadd.f32 %v640, %v673
      %v693 = vadd.f32 %v641, %v675
      %v694 = vadd.f32 %v642, %v677
      %v695 = vadd.f32 %v643, %v679
      %696 = vset.pattern.permute.xlu0 9
      %697 = vperm.xlu0 %696, %v226
      %v698 = vpop.permute.xlu0 %697
      %v700 = vlaneseq
      %v701 = vshrl.u32 %v700, 7
      %v702 = vsub.s32 1, %v701
      %v703 = vrot.slane %v218, %v702
      %v704 = vlaneseq
      %v705 = vshrl.u32 %v704, 7
      %v706 = vsub.s32 1, %v705
      %v707 = vrot.slane %v219, %v706
      %v708 = vlaneseq
      %v709 = vshrl.u32 %v708, 7
      %v710 = vsub.s32 1, %v709
      %v711 = vrot.slane %v220, %v710
      %v712 = vlaneseq
      %v713 = vshrl.u32 %v712, 7
      %v714 = vsub.s32 1, %v713
      %v715 = vrot.slane %v221, %v714
      %v716 = vlaneseq
      %v717 = vshrl.u32 %v716, 7
      %v718 = vsub.s32 1, %v717
      %v719 = vrot.slane %v222, %v718
      %v720 = vlaneseq
      %v721 = vshrl.u32 %v720, 7
      %v722 = vsub.s32 1, %v721
      %v723 = vrot.slane %v223, %v722
      %v724 = vlaneseq
      %v725 = vshrl.u32 %v724, 7
      %v726 = vsub.s32 1, %v725
      %v727 = vrot.slane %v224, %v726
      %v728 = vlaneseq
      %v729 = vshrl.u32 %v728, 7
      %v730 = vsub.s32 1, %v729
      %v731 = vrot.slane %v225, %v730
      %v732 = vmul.f32 %v698, %v703
      %v733 = vmul.f32 %v698, %v707
      %v734 = vmul.f32 %v698, %v711
      %v735 = vmul.f32 %v698, %v715
      %v736 = vmul.f32 %v698, %v719
      %v737 = vmul.f32 %v698, %v723
      %v738 = vmul.f32 %v698, %v727
      %v739 = vmul.f32 %v698, %v731
      %v740 = vadd.f32 %v688, %v732
      %v741 = vadd.f32 %v689, %v733
      %v742 = vadd.f32 %v690, %v734
      %v743 = vadd.f32 %v691, %v735
      %v744 = vadd.f32 %v692, %v736
      %v745 = vadd.f32 %v693, %v737
      %v746 = vadd.f32 %v694, %v738
      %v747 = vadd.f32 %v695, %v739
      %748 = vset.pattern.permute.xlu0 10
      %749 = vperm.xlu0 %748, %v226
      %v750 = vpop.permute.xlu0 %749
      %v752 = vmul.f32 %v750, %v703
      %v753 = vmul.f32 %v750, %v707
      %v754 = vmul.f32 %v750, %v711
      %v755 = vmul.f32 %v750, %v715
      %v756 = vmul.f32 %v750, %v719
      %v757 = vmul.f32 %v750, %v723
      %v758 = vmul.f32 %v750, %v727
      %v759 = vmul.f32 %v750, %v731
      %768 = vrot.lane.b32.xlu0 %v752, 127
      %v769 = vpop.permute.xlu0 %768
      %770 = vrot.lane.b32.xlu0 %v753, 127
      %v771 = vpop.permute.xlu0 %770
      %772 = vrot.lane.b32.xlu0 %v754, 127
      %v773 = vpop.permute.xlu0 %772
      %774 = vrot.lane.b32.xlu0 %v755, 127
      %v775 = vpop.permute.xlu0 %774
      %776 = vrot.lane.b32.xlu0 %v756, 127
      %v777 = vpop.permute.xlu0 %776
      %778 = vrot.lane.b32.xlu0 %v757, 127
      %v779 = vpop.permute.xlu0 %778
      %780 = vrot.lane.b32.xlu0 %v758, 127
      %v781 = vpop.permute.xlu0 %780
      %782 = vrot.lane.b32.xlu0 %v759, 127
      %v783 = vpop.permute.xlu0 %782
      %v792 = vadd.f32 %v740, %v769
      %v793 = vadd.f32 %v741, %v771
      %v794 = vadd.f32 %v742, %v773
      %v795 = vadd.f32 %v743, %v775
      %v796 = vadd.f32 %v744, %v777
      %v797 = vadd.f32 %v745, %v779
      %v798 = vadd.f32 %v746, %v781
      %v799 = vadd.f32 %v747, %v783
      %800 = vset.pattern.permute.xlu0 11
      %801 = vperm.xlu0 %800, %v226
      %v802 = vpop.permute.xlu0 %801
      %v804 = vmul.f32 %v802, %v703
      %v805 = vmul.f32 %v802, %v707
      %v806 = vmul.f32 %v802, %v711
      %v807 = vmul.f32 %v802, %v715
      %v808 = vmul.f32 %v802, %v719
      %v809 = vmul.f32 %v802, %v723
      %v810 = vmul.f32 %v802, %v727
      %v811 = vmul.f32 %v802, %v731
      %820 = vrot.lane.b32.xlu0 %v804, 126
      %v821 = vpop.permute.xlu0 %820
      %822 = vrot.lane.b32.xlu0 %v805, 126
      %v823 = vpop.permute.xlu0 %822
      %824 = vrot.lane.b32.xlu0 %v806, 126
      %v825 = vpop.permute.xlu0 %824
      %826 = vrot.lane.b32.xlu0 %v807, 126
      %v827 = vpop.permute.xlu0 %826
      %828 = vrot.lane.b32.xlu0 %v808, 126
      %v829 = vpop.permute.xlu0 %828
      %830 = vrot.lane.b32.xlu0 %v809, 126
      %v831 = vpop.permute.xlu0 %830
      %832 = vrot.lane.b32.xlu0 %v810, 126
      %v833 = vpop.permute.xlu0 %832
      %834 = vrot.lane.b32.xlu0 %v811, 126
      %v835 = vpop.permute.xlu0 %834
      %v844 = vadd.f32 %v792, %v821
      %v845 = vadd.f32 %v793, %v823
      %v846 = vadd.f32 %v794, %v825
      %v847 = vadd.f32 %v795, %v827
      %v848 = vadd.f32 %v796, %v829
      %v849 = vadd.f32 %v797, %v831
      %v850 = vadd.f32 %v798, %v833
      %v851 = vadd.f32 %v799, %v835
      %852 = vset.pattern.permute.xlu0 12
      %853 = vperm.xlu0 %852, %v226
      %v854 = vpop.permute.xlu0 %853
      %v856 = vmul.f32 %v854, %v703
      %v857 = vmul.f32 %v854, %v707
      %v858 = vmul.f32 %v854, %v711
      %v859 = vmul.f32 %v854, %v715
      %v860 = vmul.f32 %v854, %v719
      %v861 = vmul.f32 %v854, %v723
      %v862 = vmul.f32 %v854, %v727
      %v863 = vmul.f32 %v854, %v731
      %872 = vrot.lane.b32.xlu0 %v856, 118
      %v873 = vpop.permute.xlu0 %872
      %874 = vrot.lane.b32.xlu0 %v857, 118
      %v875 = vpop.permute.xlu0 %874
      %876 = vrot.lane.b32.xlu0 %v858, 118
      %v877 = vpop.permute.xlu0 %876
      %878 = vrot.lane.b32.xlu0 %v859, 118
      %v879 = vpop.permute.xlu0 %878
      %880 = vrot.lane.b32.xlu0 %v860, 118
      %v881 = vpop.permute.xlu0 %880
      %882 = vrot.lane.b32.xlu0 %v861, 118
      %v883 = vpop.permute.xlu0 %882
      %884 = vrot.lane.b32.xlu0 %v862, 118
      %v885 = vpop.permute.xlu0 %884
      %886 = vrot.lane.b32.xlu0 %v863, 118
      %v887 = vpop.permute.xlu0 %886
      %v896 = vadd.f32 %v844, %v873
      %v897 = vadd.f32 %v845, %v875
      %v898 = vadd.f32 %v846, %v877
      %v899 = vadd.f32 %v847, %v879
      %v900 = vadd.f32 %v848, %v881
      %v901 = vadd.f32 %v849, %v883
      %v902 = vadd.f32 %v850, %v885
      %v903 = vadd.f32 %v851, %v887
      %904 = vset.pattern.permute.xlu0 13
      %905 = vperm.xlu0 %904, %v226
      %v906 = vpop.permute.xlu0 %905
      %v908 = vmul.f32 %v906, %v703
      %v909 = vmul.f32 %v906, %v707
      %v910 = vmul.f32 %v906, %v711
      %v911 = vmul.f32 %v906, %v715
      %v912 = vmul.f32 %v906, %v719
      %v913 = vmul.f32 %v906, %v723
      %v914 = vmul.f32 %v906, %v727
      %v915 = vmul.f32 %v906, %v731
      %924 = vrot.lane.b32.xlu0 %v908, 117
      %v925 = vpop.permute.xlu0 %924
      %926 = vrot.lane.b32.xlu0 %v909, 117
      %v927 = vpop.permute.xlu0 %926
      %928 = vrot.lane.b32.xlu0 %v910, 117
      %v929 = vpop.permute.xlu0 %928
      %930 = vrot.lane.b32.xlu0 %v911, 117
      %v931 = vpop.permute.xlu0 %930
      %932 = vrot.lane.b32.xlu0 %v912, 117
      %v933 = vpop.permute.xlu0 %932
      %934 = vrot.lane.b32.xlu0 %v913, 117
      %v935 = vpop.permute.xlu0 %934
      %936 = vrot.lane.b32.xlu0 %v914, 117
      %v937 = vpop.permute.xlu0 %936
      %938 = vrot.lane.b32.xlu0 %v915, 117
      %v939 = vpop.permute.xlu0 %938
      %v948 = vadd.f32 %v896, %v925
      %v949 = vadd.f32 %v897, %v927
      %v950 = vadd.f32 %v898, %v929
      %v951 = vadd.f32 %v899, %v931
      %v952 = vadd.f32 %v900, %v933
      %v953 = vadd.f32 %v901, %v935
      %v954 = vadd.f32 %v902, %v937
      %v955 = vadd.f32 %v903, %v939
      %956 = vset.pattern.permute.xlu0 14
      %957 = vperm.xlu0 %956, %v226
      %v958 = vpop.permute.xlu0 %957
      %v960 = vmul.f32 %v958, %v703
      %v961 = vmul.f32 %v958, %v707
      %v962 = vmul.f32 %v958, %v711
      %v963 = vmul.f32 %v958, %v715
      %v964 = vmul.f32 %v958, %v719
      %v965 = vmul.f32 %v958, %v723
      %v966 = vmul.f32 %v958, %v727
      %v967 = vmul.f32 %v958, %v731
      %976 = vrot.lane.b32.xlu0 %v960, 116
      %v977 = vpop.permute.xlu0 %976
      %978 = vrot.lane.b32.xlu0 %v961, 116
      %v979 = vpop.permute.xlu0 %978
      %980 = vrot.lane.b32.xlu0 %v962, 116
      %v981 = vpop.permute.xlu0 %980
      %982 = vrot.lane.b32.xlu0 %v963, 116
      %v983 = vpop.permute.xlu0 %982
      %984 = vrot.lane.b32.xlu0 %v964, 116
      %v985 = vpop.permute.xlu0 %984
      %986 = vrot.lane.b32.xlu0 %v965, 116
      %v987 = vpop.permute.xlu0 %986
      %988 = vrot.lane.b32.xlu0 %v966, 116
      %v989 = vpop.permute.xlu0 %988
      %990 = vrot.lane.b32.xlu0 %v967, 116
      %v991 = vpop.permute.xlu0 %990
      %v1000 = vadd.f32 %v948, %v977
      %v1001 = vadd.f32 %v949, %v979
      %v1002 = vadd.f32 %v950, %v981
      %v1003 = vadd.f32 %v951, %v983
      %v1004 = vadd.f32 %v952, %v985
      %v1005 = vadd.f32 %v953, %v987
      %v1006 = vadd.f32 %v954, %v989
      %v1007 = vadd.f32 %v955, %v991
      %1008 = vset.pattern.permute.xlu0 15
      %1009 = vperm.xlu0 %1008, %v226
      %v1010 = vpop.permute.xlu0 %1009
      %v1012 = vmul.f32 %v1010, %v703
      %v1013 = vmul.f32 %v1010, %v707
      %v1014 = vmul.f32 %v1010, %v711
      %v1015 = vmul.f32 %v1010, %v715
      %v1016 = vmul.f32 %v1010, %v719
      %v1017 = vmul.f32 %v1010, %v723
      %v1018 = vmul.f32 %v1010, %v727
      %v1019 = vmul.f32 %v1010, %v731
      %1028 = vrot.lane.b32.xlu0 %v1012, 108
      %v1029 = vpop.permute.xlu0 %1028
      %1030 = vrot.lane.b32.xlu0 %v1013, 108
      %v1031 = vpop.permute.xlu0 %1030
      %1032 = vrot.lane.b32.xlu0 %v1014, 108
      %v1033 = vpop.permute.xlu0 %1032
      %1034 = vrot.lane.b32.xlu0 %v1015, 108
      %v1035 = vpop.permute.xlu0 %1034
      %1036 = vrot.lane.b32.xlu0 %v1016, 108
      %v1037 = vpop.permute.xlu0 %1036
      %1038 = vrot.lane.b32.xlu0 %v1017, 108
      %v1039 = vpop.permute.xlu0 %1038
      %1040 = vrot.lane.b32.xlu0 %v1018, 108
      %v1041 = vpop.permute.xlu0 %1040
      %1042 = vrot.lane.b32.xlu0 %v1019, 108
      %v1043 = vpop.permute.xlu0 %1042
      %v1052 = vadd.f32 %v1000, %v1029
      %v1053 = vadd.f32 %v1001, %v1031
      %v1054 = vadd.f32 %v1002, %v1033
      %v1055 = vadd.f32 %v1003, %v1035
      %v1056 = vadd.f32 %v1004, %v1037
      %v1057 = vadd.f32 %v1005, %v1039
      %v1058 = vadd.f32 %v1006, %v1041
      %v1059 = vadd.f32 %v1007, %v1043
      %1060 = vset.pattern.permute.xlu0 16
      %1061 = vperm.xlu0 %1060, %v226
      %v1062 = vpop.permute.xlu0 %1061
      %v1064 = vmul.f32 %v1062, %v703
      %v1065 = vmul.f32 %v1062, %v707
      %v1066 = vmul.f32 %v1062, %v711
      %v1067 = vmul.f32 %v1062, %v715
      %v1068 = vmul.f32 %v1062, %v719
      %v1069 = vmul.f32 %v1062, %v723
      %v1070 = vmul.f32 %v1062, %v727
      %v1071 = vmul.f32 %v1062, %v731
      %1080 = vrot.lane.b32.xlu0 %v1064, 107
      %v1081 = vpop.permute.xlu0 %1080
      %1082 = vrot.lane.b32.xlu0 %v1065, 107
      %v1083 = vpop.permute.xlu0 %1082
      %1084 = vrot.lane.b32.xlu0 %v1066, 107
      %v1085 = vpop.permute.xlu0 %1084
      %1086 = vrot.lane.b32.xlu0 %v1067, 107
      %v1087 = vpop.permute.xlu0 %1086
      %1088 = vrot.lane.b32.xlu0 %v1068, 107
      %v1089 = vpop.permute.xlu0 %1088
      %1090 = vrot.lane.b32.xlu0 %v1069, 107
      %v1091 = vpop.permute.xlu0 %1090
      %1092 = vrot.lane.b32.xlu0 %v1070, 107
      %v1093 = vpop.permute.xlu0 %1092
      %1094 = vrot.lane.b32.xlu0 %v1071, 107
      %v1095 = vpop.permute.xlu0 %1094
      %v1104 = vadd.f32 %v1052, %v1081
      %v1105 = vadd.f32 %v1053, %v1083
      %v1106 = vadd.f32 %v1054, %v1085
      %v1107 = vadd.f32 %v1055, %v1087
      %v1108 = vadd.f32 %v1056, %v1089
      %v1109 = vadd.f32 %v1057, %v1091
      %v1110 = vadd.f32 %v1058, %v1093
      %v1111 = vadd.f32 %v1059, %v1095
      %1112 = vset.pattern.permute.xlu0 17
      %1113 = vperm.xlu0 %1112, %v226
      %v1114 = vpop.permute.xlu0 %1113
      %v1116 = vmul.f32 %v1114, %v703
      %v1117 = vmul.f32 %v1114, %v707
      %v1118 = vmul.f32 %v1114, %v711
      %v1119 = vmul.f32 %v1114, %v715
      %v1120 = vmul.f32 %v1114, %v719
      %v1121 = vmul.f32 %v1114, %v723
      %v1122 = vmul.f32 %v1114, %v727
      %v1123 = vmul.f32 %v1114, %v731
      %1132 = vrot.lane.b32.xlu0 %v1116, 106
      %v1133 = vpop.permute.xlu0 %1132
      %1134 = vrot.lane.b32.xlu0 %v1117, 106
      %v1135 = vpop.permute.xlu0 %1134
      %1136 = vrot.lane.b32.xlu0 %v1118, 106
      %v1137 = vpop.permute.xlu0 %1136
      %1138 = vrot.lane.b32.xlu0 %v1119, 106
      %v1139 = vpop.permute.xlu0 %1138
      %1140 = vrot.lane.b32.xlu0 %v1120, 106
      %v1141 = vpop.permute.xlu0 %1140
      %1142 = vrot.lane.b32.xlu0 %v1121, 106
      %v1143 = vpop.permute.xlu0 %1142
      %1144 = vrot.lane.b32.xlu0 %v1122, 106
      %v1145 = vpop.permute.xlu0 %1144
      %1146 = vrot.lane.b32.xlu0 %v1123, 106
      %v1147 = vpop.permute.xlu0 %1146
      %v1156 = vadd.f32 %v1104, %v1133
      %v1157 = vadd.f32 %v1105, %v1135
      %v1158 = vadd.f32 %v1106, %v1137
      %v1159 = vadd.f32 %v1107, %v1139
      %v1160 = vadd.f32 %v1108, %v1141
      %v1161 = vadd.f32 %v1109, %v1143
      %v1162 = vadd.f32 %v1110, %v1145
      %v1163 = vadd.f32 %v1111, %v1147
      %1164 = vset.pattern.permute.xlu0 18
      %1165 = vperm.xlu0 %1164, %v226
      %v1166 = vpop.permute.xlu0 %1165
      %v1168 = vlaneseq
      %v1169 = vshrl.u32 %v1168, 7
      %v1170 = vsub.s32 2, %v1169
      %v1171 = vrot.slane %v218, %v1170
      %v1172 = vlaneseq
      %v1173 = vshrl.u32 %v1172, 7
      %v1174 = vsub.s32 2, %v1173
      %v1175 = vrot.slane %v219, %v1174
      %v1176 = vlaneseq
      %v1177 = vshrl.u32 %v1176, 7
      %v1178 = vsub.s32 2, %v1177
      %v1179 = vrot.slane %v220, %v1178
      %v1180 = vlaneseq
      %v1181 = vshrl.u32 %v1180, 7
      %v1182 = vsub.s32 2, %v1181
      %v1183 = vrot.slane %v221, %v1182
      %v1184 = vlaneseq
      %v1185 = vshrl.u32 %v1184, 7
      %v1186 = vsub.s32 2, %v1185
      %v1187 = vrot.slane %v222, %v1186
      %v1188 = vlaneseq
      %v1189 = vshrl.u32 %v1188, 7
      %v1190 = vsub.s32 2, %v1189
      %v1191 = vrot.slane %v223, %v1190
      %v1192 = vlaneseq
      %v1193 = vshrl.u32 %v1192, 7
      %v1194 = vsub.s32 2, %v1193
      %v1195 = vrot.slane %v224, %v1194
      %v1196 = vlaneseq
      %v1197 = vshrl.u32 %v1196, 7
      %v1198 = vsub.s32 2, %v1197
      %v1199 = vrot.slane %v225, %v1198
      %v1200 = vmul.f32 %v1166, %v1171
      %v1201 = vmul.f32 %v1166, %v1175
      %v1202 = vmul.f32 %v1166, %v1179
      %v1203 = vmul.f32 %v1166, %v1183
      %v1204 = vmul.f32 %v1166, %v1187
      %v1205 = vmul.f32 %v1166, %v1191
      %v1206 = vmul.f32 %v1166, %v1195
      %v1207 = vmul.f32 %v1166, %v1199
      %v1208 = vadd.f32 %v1156, %v1200
      %v1209 = vadd.f32 %v1157, %v1201
      %v1210 = vadd.f32 %v1158, %v1202
      %v1211 = vadd.f32 %v1159, %v1203
      %v1212 = vadd.f32 %v1160, %v1204
      %v1213 = vadd.f32 %v1161, %v1205
      %v1214 = vadd.f32 %v1162, %v1206
      %v1215 = vadd.f32 %v1163, %v1207
      %1216 = vset.pattern.permute.xlu0 19
      %1217 = vperm.xlu0 %1216, %v226
      %v1218 = vpop.permute.xlu0 %1217
      %v1220 = vmul.f32 %v1218, %v1171
      %v1221 = vmul.f32 %v1218, %v1175
      %v1222 = vmul.f32 %v1218, %v1179
      %v1223 = vmul.f32 %v1218, %v1183
      %v1224 = vmul.f32 %v1218, %v1187
      %v1225 = vmul.f32 %v1218, %v1191
      %v1226 = vmul.f32 %v1218, %v1195
      %v1227 = vmul.f32 %v1218, %v1199
      %1236 = vrot.lane.b32.xlu0 %v1220, 127
      %v1237 = vpop.permute.xlu0 %1236
      %1238 = vrot.lane.b32.xlu0 %v1221, 127
      %v1239 = vpop.permute.xlu0 %1238
      %1240 = vrot.lane.b32.xlu0 %v1222, 127
      %v1241 = vpop.permute.xlu0 %1240
      %1242 = vrot.lane.b32.xlu0 %v1223, 127
      %v1243 = vpop.permute.xlu0 %1242
      %1244 = vrot.lane.b32.xlu0 %v1224, 127
      %v1245 = vpop.permute.xlu0 %1244
      %1246 = vrot.lane.b32.xlu0 %v1225, 127
      %v1247 = vpop.permute.xlu0 %1246
      %1248 = vrot.lane.b32.xlu0 %v1226, 127
      %v1249 = vpop.permute.xlu0 %1248
      %1250 = vrot.lane.b32.xlu0 %v1227, 127
      %v1251 = vpop.permute.xlu0 %1250
      %v1260 = vadd.f32 %v1208, %v1237
      %v1261 = vadd.f32 %v1209, %v1239
      %v1262 = vadd.f32 %v1210, %v1241
      %v1263 = vadd.f32 %v1211, %v1243
      %v1264 = vadd.f32 %v1212, %v1245
      %v1265 = vadd.f32 %v1213, %v1247
      %v1266 = vadd.f32 %v1214, %v1249
      %v1267 = vadd.f32 %v1215, %v1251
      %1268 = vset.pattern.permute.xlu0 20
      %1269 = vperm.xlu0 %1268, %v226
      %v1270 = vpop.permute.xlu0 %1269
      %v1272 = vmul.f32 %v1270, %v1171
      %v1273 = vmul.f32 %v1270, %v1175
      %v1274 = vmul.f32 %v1270, %v1179
      %v1275 = vmul.f32 %v1270, %v1183
      %v1276 = vmul.f32 %v1270, %v1187
      %v1277 = vmul.f32 %v1270, %v1191
      %v1278 = vmul.f32 %v1270, %v1195
      %v1279 = vmul.f32 %v1270, %v1199
      %1288 = vrot.lane.b32.xlu0 %v1272, 126
      %v1289 = vpop.permute.xlu0 %1288
      %1290 = vrot.lane.b32.xlu0 %v1273, 126
      %v1291 = vpop.permute.xlu0 %1290
      %1292 = vrot.lane.b32.xlu0 %v1274, 126
      %v1293 = vpop.permute.xlu0 %1292
      %1294 = vrot.lane.b32.xlu0 %v1275, 126
      %v1295 = vpop.permute.xlu0 %1294
      %1296 = vrot.lane.b32.xlu0 %v1276, 126
      %v1297 = vpop.permute.xlu0 %1296
      %1298 = vrot.lane.b32.xlu0 %v1277, 126
      %v1299 = vpop.permute.xlu0 %1298
      %1300 = vrot.lane.b32.xlu0 %v1278, 126
      %v1301 = vpop.permute.xlu0 %1300
      %1302 = vrot.lane.b32.xlu0 %v1279, 126
      %v1303 = vpop.permute.xlu0 %1302
      %v1312 = vadd.f32 %v1260, %v1289
      %v1313 = vadd.f32 %v1261, %v1291
      %v1314 = vadd.f32 %v1262, %v1293
      %v1315 = vadd.f32 %v1263, %v1295
      %v1316 = vadd.f32 %v1264, %v1297
      %v1317 = vadd.f32 %v1265, %v1299
      %v1318 = vadd.f32 %v1266, %v1301
      %v1319 = vadd.f32 %v1267, %v1303
      %1320 = vset.pattern.permute.xlu0 21
      %1321 = vperm.xlu0 %1320, %v226
      %v1322 = vpop.permute.xlu0 %1321
      %v1324 = vmul.f32 %v1322, %v1171
      %v1325 = vmul.f32 %v1322, %v1175
      %v1326 = vmul.f32 %v1322, %v1179
      %v1327 = vmul.f32 %v1322, %v1183
      %v1328 = vmul.f32 %v1322, %v1187
      %v1329 = vmul.f32 %v1322, %v1191
      %v1330 = vmul.f32 %v1322, %v1195
      %v1331 = vmul.f32 %v1322, %v1199
      %1340 = vrot.lane.b32.xlu0 %v1324, 118
      %v1341 = vpop.permute.xlu0 %1340
      %1342 = vrot.lane.b32.xlu0 %v1325, 118
      %v1343 = vpop.permute.xlu0 %1342
      %1344 = vrot.lane.b32.xlu0 %v1326, 118
      %v1345 = vpop.permute.xlu0 %1344
      %1346 = vrot.lane.b32.xlu0 %v1327, 118
      %v1347 = vpop.permute.xlu0 %1346
      %1348 = vrot.lane.b32.xlu0 %v1328, 118
      %v1349 = vpop.permute.xlu0 %1348
      %1350 = vrot.lane.b32.xlu0 %v1329, 118
      %v1351 = vpop.permute.xlu0 %1350
      %1352 = vrot.lane.b32.xlu0 %v1330, 118
      %v1353 = vpop.permute.xlu0 %1352
      %1354 = vrot.lane.b32.xlu0 %v1331, 118
      %v1355 = vpop.permute.xlu0 %1354
      %v1364 = vadd.f32 %v1312, %v1341
      %v1365 = vadd.f32 %v1313, %v1343
      %v1366 = vadd.f32 %v1314, %v1345
      %v1367 = vadd.f32 %v1315, %v1347
      %v1368 = vadd.f32 %v1316, %v1349
      %v1369 = vadd.f32 %v1317, %v1351
      %v1370 = vadd.f32 %v1318, %v1353
      %v1371 = vadd.f32 %v1319, %v1355
      %1372 = vset.pattern.permute.xlu0 22
      %1373 = vperm.xlu0 %1372, %v226
      %v1374 = vpop.permute.xlu0 %1373
      %v1376 = vmul.f32 %v1374, %v1171
      %v1377 = vmul.f32 %v1374, %v1175
      %v1378 = vmul.f32 %v1374, %v1179
      %v1379 = vmul.f32 %v1374, %v1183
      %v1380 = vmul.f32 %v1374, %v1187
      %v1381 = vmul.f32 %v1374, %v1191
      %v1382 = vmul.f32 %v1374, %v1195
      %v1383 = vmul.f32 %v1374, %v1199
      %1392 = vrot.lane.b32.xlu0 %v1376, 117
      %v1393 = vpop.permute.xlu0 %1392
      %1394 = vrot.lane.b32.xlu0 %v1377, 117
      %v1395 = vpop.permute.xlu0 %1394
      %1396 = vrot.lane.b32.xlu0 %v1378, 117
      %v1397 = vpop.permute.xlu0 %1396
      %1398 = vrot.lane.b32.xlu0 %v1379, 117
      %v1399 = vpop.permute.xlu0 %1398
      %1400 = vrot.lane.b32.xlu0 %v1380, 117
      %v1401 = vpop.permute.xlu0 %1400
      %1402 = vrot.lane.b32.xlu0 %v1381, 117
      %v1403 = vpop.permute.xlu0 %1402
      %1404 = vrot.lane.b32.xlu0 %v1382, 117
      %v1405 = vpop.permute.xlu0 %1404
      %1406 = vrot.lane.b32.xlu0 %v1383, 117
      %v1407 = vpop.permute.xlu0 %1406
      %v1416 = vadd.f32 %v1364, %v1393
      %v1417 = vadd.f32 %v1365, %v1395
      %v1418 = vadd.f32 %v1366, %v1397
      %v1419 = vadd.f32 %v1367, %v1399
      %v1420 = vadd.f32 %v1368, %v1401
      %v1421 = vadd.f32 %v1369, %v1403
      %v1422 = vadd.f32 %v1370, %v1405
      %v1423 = vadd.f32 %v1371, %v1407
      %1424 = vset.pattern.permute.xlu0 23
      %1425 = vperm.xlu0 %1424, %v226
      %v1426 = vpop.permute.xlu0 %1425
      %v1428 = vmul.f32 %v1426, %v1171
      %v1429 = vmul.f32 %v1426, %v1175
      %v1430 = vmul.f32 %v1426, %v1179
      %v1431 = vmul.f32 %v1426, %v1183
      %v1432 = vmul.f32 %v1426, %v1187
      %v1433 = vmul.f32 %v1426, %v1191
      %v1434 = vmul.f32 %v1426, %v1195
      %v1435 = vmul.f32 %v1426, %v1199
      %1444 = vrot.lane.b32.xlu0 %v1428, 116
      %v1445 = vpop.permute.xlu0 %1444
      %1446 = vrot.lane.b32.xlu0 %v1429, 116
      %v1447 = vpop.permute.xlu0 %1446
      %1448 = vrot.lane.b32.xlu0 %v1430, 116
      %v1449 = vpop.permute.xlu0 %1448
      %1450 = vrot.lane.b32.xlu0 %v1431, 116
      %v1451 = vpop.permute.xlu0 %1450
      %1452 = vrot.lane.b32.xlu0 %v1432, 116
      %v1453 = vpop.permute.xlu0 %1452
      %1454 = vrot.lane.b32.xlu0 %v1433, 116
      %v1455 = vpop.permute.xlu0 %1454
      %1456 = vrot.lane.b32.xlu0 %v1434, 116
      %v1457 = vpop.permute.xlu0 %1456
      %1458 = vrot.lane.b32.xlu0 %v1435, 116
      %v1459 = vpop.permute.xlu0 %1458
      %v1468 = vadd.f32 %v1416, %v1445
      %v1469 = vadd.f32 %v1417, %v1447
      %v1470 = vadd.f32 %v1418, %v1449
      %v1471 = vadd.f32 %v1419, %v1451
      %v1472 = vadd.f32 %v1420, %v1453
      %v1473 = vadd.f32 %v1421, %v1455
      %v1474 = vadd.f32 %v1422, %v1457
      %v1475 = vadd.f32 %v1423, %v1459
      %1476 = vset.pattern.permute.xlu0 24
      %1477 = vperm.xlu0 %1476, %v226
      %v1478 = vpop.permute.xlu0 %1477
      %v1480 = vmul.f32 %v1478, %v1171
      %v1481 = vmul.f32 %v1478, %v1175
      %v1482 = vmul.f32 %v1478, %v1179
      %v1483 = vmul.f32 %v1478, %v1183
      %v1484 = vmul.f32 %v1478, %v1187
      %v1485 = vmul.f32 %v1478, %v1191
      %v1486 = vmul.f32 %v1478, %v1195
      %v1487 = vmul.f32 %v1478, %v1199
      %1496 = vrot.lane.b32.xlu0 %v1480, 108
      %v1497 = vpop.permute.xlu0 %1496
      %1498 = vrot.lane.b32.xlu0 %v1481, 108
      %v1499 = vpop.permute.xlu0 %1498
      %1500 = vrot.lane.b32.xlu0 %v1482, 108
      %v1501 = vpop.permute.xlu0 %1500
      %1502 = vrot.lane.b32.xlu0 %v1483, 108
      %v1503 = vpop.permute.xlu0 %1502
      %1504 = vrot.lane.b32.xlu0 %v1484, 108
      %v1505 = vpop.permute.xlu0 %1504
      %1506 = vrot.lane.b32.xlu0 %v1485, 108
      %v1507 = vpop.permute.xlu0 %1506
      %1508 = vrot.lane.b32.xlu0 %v1486, 108
      %v1509 = vpop.permute.xlu0 %1508
      %1510 = vrot.lane.b32.xlu0 %v1487, 108
      %v1511 = vpop.permute.xlu0 %1510
      %v1520 = vadd.f32 %v1468, %v1497
      %v1521 = vadd.f32 %v1469, %v1499
      %v1522 = vadd.f32 %v1470, %v1501
      %v1523 = vadd.f32 %v1471, %v1503
      %v1524 = vadd.f32 %v1472, %v1505
      %v1525 = vadd.f32 %v1473, %v1507
      %v1526 = vadd.f32 %v1474, %v1509
      %v1527 = vadd.f32 %v1475, %v1511
      %1528 = vset.pattern.permute.xlu0 25
      %1529 = vperm.xlu0 %1528, %v226
      %v1530 = vpop.permute.xlu0 %1529
      %v1532 = vmul.f32 %v1530, %v1171
      %v1533 = vmul.f32 %v1530, %v1175
      %v1534 = vmul.f32 %v1530, %v1179
      %v1535 = vmul.f32 %v1530, %v1183
      %v1536 = vmul.f32 %v1530, %v1187
      %v1537 = vmul.f32 %v1530, %v1191
      %v1538 = vmul.f32 %v1530, %v1195
      %v1539 = vmul.f32 %v1530, %v1199
      %1548 = vrot.lane.b32.xlu0 %v1532, 107
      %v1549 = vpop.permute.xlu0 %1548
      %1550 = vrot.lane.b32.xlu0 %v1533, 107
      %v1551 = vpop.permute.xlu0 %1550
      %1552 = vrot.lane.b32.xlu0 %v1534, 107
      %v1553 = vpop.permute.xlu0 %1552
      %1554 = vrot.lane.b32.xlu0 %v1535, 107
      %v1555 = vpop.permute.xlu0 %1554
      %1556 = vrot.lane.b32.xlu0 %v1536, 107
      %v1557 = vpop.permute.xlu0 %1556
      %1558 = vrot.lane.b32.xlu0 %v1537, 107
      %v1559 = vpop.permute.xlu0 %1558
      %1560 = vrot.lane.b32.xlu0 %v1538, 107
      %v1561 = vpop.permute.xlu0 %1560
      %1562 = vrot.lane.b32.xlu0 %v1539, 107
      %v1563 = vpop.permute.xlu0 %1562
      %v1572 = vadd.f32 %v1520, %v1549
      %v1573 = vadd.f32 %v1521, %v1551
      %v1574 = vadd.f32 %v1522, %v1553
      %v1575 = vadd.f32 %v1523, %v1555
      %v1576 = vadd.f32 %v1524, %v1557
      %v1577 = vadd.f32 %v1525, %v1559
      %v1578 = vadd.f32 %v1526, %v1561
      %v1579 = vadd.f32 %v1527, %v1563
      %1580 = vset.pattern.permute.xlu0 26
      %1581 = vperm.xlu0 %1580, %v226
      %v1582 = vpop.permute.xlu0 %1581
      %v1584 = vmul.f32 %v1582, %v1171
      %v1585 = vmul.f32 %v1582, %v1175
      %v1586 = vmul.f32 %v1582, %v1179
      %v1587 = vmul.f32 %v1582, %v1183
      %v1588 = vmul.f32 %v1582, %v1187
      %v1589 = vmul.f32 %v1582, %v1191
      %v1590 = vmul.f32 %v1582, %v1195
      %v1591 = vmul.f32 %v1582, %v1199
      %1600 = vrot.lane.b32.xlu0 %v1584, 106
      %v1601 = vpop.permute.xlu0 %1600
      %1602 = vrot.lane.b32.xlu0 %v1585, 106
      %v1603 = vpop.permute.xlu0 %1602
      %1604 = vrot.lane.b32.xlu0 %v1586, 106
      %v1605 = vpop.permute.xlu0 %1604
      %1606 = vrot.lane.b32.xlu0 %v1587, 106
      %v1607 = vpop.permute.xlu0 %1606
      %1608 = vrot.lane.b32.xlu0 %v1588, 106
      %v1609 = vpop.permute.xlu0 %1608
      %1610 = vrot.lane.b32.xlu0 %v1589, 106
      %v1611 = vpop.permute.xlu0 %1610
      %1612 = vrot.lane.b32.xlu0 %v1590, 106
      %v1613 = vpop.permute.xlu0 %1612
      %1614 = vrot.lane.b32.xlu0 %v1591, 106
      %v1615 = vpop.permute.xlu0 %1614
      %v1624 = vadd.f32 %v1572, %v1601
      %v1625 = vadd.f32 %v1573, %v1603
      %v1626 = vadd.f32 %v1574, %v1605
      %v1627 = vadd.f32 %v1575, %v1607
      %v1628 = vadd.f32 %v1576, %v1609
      %v1629 = vadd.f32 %v1577, %v1611
      %v1630 = vadd.f32 %v1578, %v1613
      %v1631 = vadd.f32 %v1579, %v1615
      %p1632 = scmp.eq.s32.totalorder %s19, 0
      // Predicated region
      $region37: #{model_forward.1} parent=35 // pred_check
        %p1633 = pneg %p1632
      $region38: #{model_forward.1} parent=35 // pred_check_branch
        %1635 = sbr.rel (%p1633) target = $region40
      $region39: #{model_forward.1} parent=35 // pred_region
        %p1636 = scmp.eq.s32.totalorder %s20, 0
        // Predicated region
        $region41: #{model_forward.1} parent=39 // pred_check
          %p1637 = pneg %p1636
        $region42: #{model_forward.1} parent=39 // pred_check_branch
          %1639 = sbr.rel (%p1637) target = $region44
        $region43: #{model_forward.1} parent=39 // pred_region
          %vm1640 = vcmask 15360
          %1641 = vst.msk [vmem:[#allocation2] sm:$0xff] %vm1640, 0.0
        $region44: #{model_forward.1} parent=39 // pred_fallthru
          _
        %v1642 = vld [vmem:[%s3] sm:$0x1]
        %v1644 = vlaneseq
        %v1645 = vshrl.u32 %v1644, 7
        %v1646 = vsub.s32 0, %v1645
        %v1647 = vrot.slane %v1642, %v1646
        %v1649 = vmul.f32 %v1624, %v1647
        %v1650 = vmul.f32 %v1625, %v1647
        %v1651 = vmul.f32 %v1626, %v1647
        %v1652 = vmul.f32 %v1627, %v1647
        %v1653 = vmul.f32 %v1628, %v1647
        %v1654 = vmul.f32 %v1629, %v1647
        %v1655 = vmul.f32 %v1630, %v1647
        %v1656 = vmul.f32 %v1631, %v1647
        %vm1657 = vcmask 654336
        %v1658 = vsel %vm1657, %v1649, 0.0
        %1659 = vadd.xlane.f32.xlu0 %v1658
        %v1660 = vpop.xlane.xlu0 %1659
        %v1661 = vsel %vm1657, %v1650, 0.0
        %1662 = vadd.xlane.f32.xlu0 %v1661
        %v1663 = vpop.xlane.xlu0 %1662
        %v1664 = vsel %vm1657, %v1651, 0.0
        %1665 = vadd.xlane.f32.xlu0 %v1664
        %v1666 = vpop.xlane.xlu0 %1665
        %v1667 = vsel %vm1657, %v1652, 0.0
        %1668 = vadd.xlane.f32.xlu0 %v1667
        %v1669 = vpop.xlane.xlu0 %1668
        %v1670 = vsel %vm1657, %v1653, 0.0
        %1671 = vadd.xlane.f32.xlu0 %v1670
        %v1672 = vpop.xlane.xlu0 %1671
        %v1673 = vsel %vm1657, %v1654, 0.0
        %1674 = vadd.xlane.f32.xlu0 %v1673
        %v1675 = vpop.xlane.xlu0 %1674
        %v1676 = vsel %vm1657, %v1655, 0.0
        %1677 = vadd.xlane.f32.xlu0 %v1676
        %v1678 = vpop.xlane.xlu0 %1677
        %v1679 = vsel %vm1657, %v1656, 0.0
        %1680 = vadd.xlane.f32.xlu0 %v1679
        %v1681 = vpop.xlane.xlu0 %1680
        %v1682 = vadd.f32 %v1660, %v1663
        %v1683 = vadd.f32 %v1682, %v1666
        %v1684 = vadd.f32 %v1683, %v1669
        %v1685 = vadd.f32 %v1684, %v1672
        %v1686 = vadd.f32 %v1685, %v1675
        %v1687 = vadd.f32 %v1686, %v1678
        %v1688 = vadd.f32 %v1687, %v1681
        %v1689 = vmul.f32 %v1649, %v1624
        %v1690 = vmul.f32 %v1650, %v1625
        %v1691 = vmul.f32 %v1651, %v1626
        %v1692 = vmul.f32 %v1652, %v1627
        %v1693 = vmul.f32 %v1653, %v1628
        %v1694 = vmul.f32 %v1654, %v1629
        %v1695 = vmul.f32 %v1655, %v1630
        %v1696 = vmul.f32 %v1656, %v1631
        %v1697 = vsel %vm1657, %v1689, 0.0
        %1698 = vadd.xlane.f32.xlu0 %v1697
        %v1699 = vpop.xlane.xlu0 %1698
        %v1700 = vsel %vm1657, %v1690, 0.0
        %1701 = vadd.xlane.f32.xlu0 %v1700
        %v1702 = vpop.xlane.xlu0 %1701
        %v1703 = vsel %vm1657, %v1691, 0.0
        %1704 = vadd.xlane.f32.xlu0 %v1703
        %v1705 = vpop.xlane.xlu0 %1704
        %v1706 = vsel %vm1657, %v1692, 0.0
        %1707 = vadd.xlane.f32.xlu0 %v1706
        %v1708 = vpop.xlane.xlu0 %1707
        %v1709 = vsel %vm1657, %v1693, 0.0
        %1710 = vadd.xlane.f32.xlu0 %v1709
        %v1711 = vpop.xlane.xlu0 %1710
        %v1712 = vsel %vm1657, %v1694, 0.0
        %1713 = vadd.xlane.f32.xlu0 %v1712
        %v1714 = vpop.xlane.xlu0 %1713
        %v1715 = vsel %vm1657, %v1695, 0.0
        %1716 = vadd.xlane.f32.xlu0 %v1715
        %v1717 = vpop.xlane.xlu0 %1716
        %v1718 = vsel %vm1657, %v1696, 0.0
        %1719 = vadd.xlane.f32.xlu0 %v1718
        %v1720 = vpop.xlane.xlu0 %1719
        %v1721 = vadd.f32 %v1699, %v1702
        %v1722 = vadd.f32 %v1721, %v1705
        %v1723 = vadd.f32 %v1722, %v1708
        %v1724 = vadd.f32 %v1723, %v1711
        %v1725 = vadd.f32 %v1724, %v1714
        %v1726 = vadd.f32 %v1725, %v1717
        %v1727 = vadd.f32 %v1726, %v1720
        %v1728 = vld [vmem:[#allocation2] sm:$0xff]
        %vm1729 = vcmask 7168
        %v1730 = vsel %vm1729, %v1688, %v1727
        %v1731 = vadd.f32 %v1728, %v1730
        %vm1732 = vcmask 15360
        %1733 = vst.msk [vmem:[#allocation2] sm:$0xff] %vm1732, %v1731
        %p1734 = scmp.eq.s32.totalorder %s20, 3
        // Predicated region
        $region45: #{model_forward.1} parent=39 // pred_check
          %p1735 = pneg %p1734
        $region46: #{model_forward.1} parent=39 // pred_check_branch
          %1737 = sbr.rel (%p1735) target = $region48
        $region47: #{model_forward.1} parent=39 // pred_region
          %v1738 = vld [vmem:[#allocation2] sm:$0xff]
          %v1739 = vmul.f32 %v1738, 0.00048828125
          %v1740 = vmul.f32 %v1739, %v1739
          %1742 = vrot.lane.b32.xlu0 %v1740, 1
          %v1743 = vpop.permute.xlu0 %1742
          %v1745 = vsub.f32 %v1739, %v1743
          %v1746 = vmax.f32 %v1745, 0.0
          %v1747 = vld [vmem:[%s2] sm:$0xff]
          %v1748 = vadd.f32 %v1746, 1e-05
          %v1749 = vrsqrt.pop %v1748
          %1751 = vrot.lane.b32.xlu0 %v1749, 127
          %v1752 = vpop.permute.xlu0 %1751
          %v1754 = vmul.f32 %v1747, %v1752
          %v1755 = vmul.f32 %v1739, %v1754
          %1757 = vrot.lane.b32.xlu0 %v1755, 1
          %v1758 = vpop.permute.xlu0 %1757
          %v1760 = vsub.f32 %v1747, %v1758
          %v1761 = vsel %vm1729, %v1754, %v1760
          %1762 = vst.msk [vmem:[#allocation2] sm:$0xff] %vm1732, %v1761
        $region48: #{model_forward.1} parent=39 // pred_fallthru
          _
      $region40: #{model_forward.1} parent=35 // pred_fallthru
        _
      %p1763 = scmp.eq.s32.totalorder %s19, 1
      // Predicated region
      $region49: #{model_forward.1} parent=35 // pred_check
        %p1764 = pneg %p1763
      $region50: #{model_forward.1} parent=35 // pred_check_branch
        %1766 = sbr.rel (%p1764) target = $region52
      $region51: #{model_forward.1} parent=35 // pred_region
        %v1767 = vld [vmem:[#allocation2] sm:$0xff]
        %1769 = vset.pattern.permute.xlu0 0
        %1770 = vperm.xlu0 %1769, %v1767
        %v1771 = vpop.permute.xlu0 %1770
        %v1773 = vmul.f32 %v1624, %v1771
        %v1774 = vmul.f32 %v1625, %v1771
        %v1775 = vmul.f32 %v1626, %v1771
        %v1776 = vmul.f32 %v1627, %v1771
        %v1777 = vmul.f32 %v1628, %v1771
        %v1778 = vmul.f32 %v1629, %v1771
        %v1779 = vmul.f32 %v1630, %v1771
        %v1780 = vmul.f32 %v1631, %v1771
        %1781 = vset.pattern.permute.xlu0 1
        %1782 = vperm.xlu0 %1781, %v1767
        %v1783 = vpop.permute.xlu0 %1782
        %v1785 = vadd.f32 %v1773, %v1783
        %v1786 = vadd.f32 %v1774, %v1783
        %v1787 = vadd.f32 %v1775, %v1783
        %v1788 = vadd.f32 %v1776, %v1783
        %v1789 = vadd.f32 %v1777, %v1783
        %v1790 = vadd.f32 %v1778, %v1783
        %v1791 = vadd.f32 %v1779, %v1783
        %v1792 = vadd.f32 %v1780, %v1783
        %v1801 = vrot.slane %v1785, 4
        %v1802 = vrot.slane %v1786, 4
        %v1803 = vrot.slane %v1787, 4
        %v1804 = vrot.slane %v1788, 4
        %v1805 = vrot.slane %v1789, 4
        %v1806 = vrot.slane %v1790, 4
        %v1807 = vrot.slane %v1791, 4
        %v1808 = vrot.slane %v1792, 4
        %v1817 = vadd.f32 %v1785, %v1801
        %v1818 = vadd.f32 %v1786, %v1802
        %v1819 = vadd.f32 %v1787, %v1803
        %v1820 = vadd.f32 %v1788, %v1804
        %v1821 = vadd.f32 %v1789, %v1805
        %v1822 = vadd.f32 %v1790, %v1806
        %v1823 = vadd.f32 %v1791, %v1807
        %v1824 = vadd.f32 %v1792, %v1808
        %vm1825 = vcmask 650240
        %1826 = vst.msk [vmem:[%s215] sm:$0xf] %vm1825, %v1817
        %1827 = vst.msk [vmem:[%s215 + $0x4] sm:$0xf] %vm1825, %v1818
        %1828 = vst.msk [vmem:[%s215 + $0x8] sm:$0xf] %vm1825, %v1819
        %1829 = vst.msk [vmem:[%s215 + $0xc] sm:$0xf] %vm1825, %v1820
        %1830 = vst.msk [vmem:[%s215 + $0x10] sm:$0xf] %vm1825, %v1821
        %1831 = vst.msk [vmem:[%s215 + $0x14] sm:$0xf] %vm1825, %v1822
        %1832 = vst.msk [vmem:[%s215 + $0x18] sm:$0xf] %vm1825, %v1823
        %1833 = vst.msk [vmem:[%s215 + $0x1c] sm:$0xf] %vm1825, %v1824
      $region52: #{model_forward.1} parent=35 // pred_fallthru
        _
      %s1834 = smul.u32 %s20, %s19
      %s1835 = smul.u32 8, %s1834
      %p1836 = scmp.lt.s32.totalorder %s1835, 31
      %s1837 = scalar_select %p1836, %s1835, 31
      %s1838 = smul.addr %s1837, 4
      %s1839 = scalar_lea.vmem %s4, %s1838
      // Predicated region
      $region53: #{model_forward.1} parent=35 // pred_check
        %p1840 = pneg %p136
      $region54: #{model_forward.1} parent=35 // pred_check_branch
        %1842 = sbr.rel (%p1840) target = $region56
      $region55: #{model_forward.1} parent=35 // pred_region
        %s1843 = smul.u32 %s20, %s19
        %s1844 = smul.u32 8, %s1843
      $region56: #{model_forward.1} parent=35 // pred_fallthru
        _
    $region36: #{model_forward.1} parent=5 // pred_fallthru
      _
    %p1845 = scmp.le.s32.totalorder 2, %s10
    // Predicated region
    $region57: #{model_forward.1} parent=5 // pred_check
      %p1846 = pneg %p1845
    $region58: #{model_forward.1} parent=5 // pred_check_branch
      %1848 = sbr.rel (%p1846) target = $region60
    $region59: #{model_forward.1} parent=5 // pred_region
      %s1849 = ssub.s32 %s10, 2
      // Predicated region
      $region61: #{model_forward.1} parent=59 // pred_check
        %p1850 = pneg %p142
      $region62: #{model_forward.1} parent=59 // pred_check_branch
        %1852 = sbr.rel (%p1850) target = $region64
      $region63: #{model_forward.1} parent=59 // pred_region
        %s1853 = smul.u32 %s22, %s21
        %s1854 = smul.u32 8, %s1853
        %p1855 = scmp.lt.s32.totalorder %s1854, 31
        %s1856 = scalar_select %p1855, %s1854, 31
        %s1857 = smul.addr %s1856, 4
        %s1858 = scalar_lea.vmem %s4, %s1857
      $region64: #{model_forward.1} parent=59 // pred_fallthru
        _
    $region60: #{model_forward.1} parent=5 // pred_fallthru
      _
  $region6: #{model_forward.1} parent=0 // loop_footer
    %s14 = sadd.s32 1, %s10
  $region7: #{model_forward.1} parent=0 // loop_footer_branch
    %9 = sbr.rel target = $region3
  $region8: #{model_forward.1} parent=0 // loop_exit
    _

</llo_original>
